<compile_context>
chip_gen: v6e
topology: v6e:2x2x1
jax: 0.10.0
libtpu: 0.0.40
codegen_flags: <defaults>
</compile_context>

<pallas_src>
import math
import functools

import numpy as np
import jax
import jax.numpy as jnp
from jax.experimental import pallas as pl
from jax.experimental.pallas import tpu as pltpu


# ----------------------- per-generation hardware budget -----------------------


def _round_up(x, m):
    return ((x + m - 1) // m) * m


def _vmem_capacity_bytes():
    try:
        return int(pltpu.get_tpu_info().vmem_capacity_bytes)
    except Exception:
        return 64 * 1024 * 1024          # conservative fallback (v7x per-core)


def _num_tensorcores():
    # v7x has 2 TensorCores per chip (shard 'parallel' axes); v5e/v6e have 1.
    try:
        kind = jax.devices()[0].device_kind.lower()
    except Exception:
        return 1
    return 2 if "v7" in kind else 1


_VMEM_CAP = _vmem_capacity_bytes()
# ~96 MiB on 128 MiB parts (v5e/v6e), ~48 MiB on 64 MiB v7x.
_VMEM_LIMIT = int(min(0.75 * _VMEM_CAP, _VMEM_CAP - (8 << 20)))
_NUM_TC = _num_tensorcores()
_ROW_TILE_TARGET = 512 if _VMEM_CAP >= (100 << 20) else 256
_KV_TILE_TARGET = 512


def _probe_single_buffering():
    """True iff BlockSpec(pipeline_mode=pl.Buffered(1)) lowers & runs here."""
    try:
        def _copy(x_ref, o_ref):
            o_ref[...] = x_ref[...]

        fn = pl.pallas_call(
            _copy,
            out_shape=jax.ShapeDtypeStruct((8, 128), jnp.float32),
            grid_spec=pltpu.PrefetchScalarGridSpec(
                num_scalar_prefetch=0,
                grid=(2,),
                in_specs=[pl.BlockSpec((8, 128), lambda i: (0, 0),
                                       pipeline_mode=pl.Buffered(1))],
                out_specs=pl.BlockSpec((8, 128), lambda i: (0, 0)),
            ),
        )
        jax.block_until_ready(fn(jnp.zeros((8, 128), jnp.float32)))
        return True
    except Exception:
        return False


_SINGLE_BUFFER_OK = _probe_single_buffering()


def _const_spec(shape, index_map):
    """Spec for grid-invariant operands (weights / biases / LN params).

    Such blocks never change across the grid, so the default double buffer is
    pure VMEM waste; single-buffer them when the backend supports it (this is
    what makes the resident FFN weights fit v7x's 64 MiB VMEM at large D/F).
    """
    if _SINGLE_BUFFER_OK:
        return pl.BlockSpec(shape, index_map, pipeline_mode=pl.Buffered(1))
    return pl.BlockSpec(shape, index_map)


# ------------------------------ tiling helpers ------------------------------


def _row_tiling(rows, target):
    """Row (sublane) tile and padded row count for row-wise kernels.

    Pads to a multiple-of-8 tile instead of hunting for divisors (avoids both
    tiny tm and one giant block); guarantees >=2 blocks on 2-TC chips so the
    'parallel' row axis can be sharded across both TensorCores.
    """
    target = max(8, (int(target) // 8) * 8)
    tm = min(target, _round_up(rows, 8))
    rows_pad = _round_up(rows, tm)
    if _NUM_TC >= 2 and rows_pad // tm < 2 and rows > 8:
        tm = _round_up((rows + 1) // 2, 8)
        rows_pad = 2 * tm
    return tm, rows_pad


def _pick_col_tile(cols, d_in, vmem_limit):
    """Lane tile for a (d_in, cols) bf16 weight streamed column-block-major."""
    if cols <= 128:
        return cols                      # block == full dim (always legal)
    # The double-buffered bf16 weight block should use <= ~1/3 of the budget.
    max_tn = max(128, (vmem_limit // 3) // (2 * 2 * d_in))
    best = 0
    for c in range(128, min(cols, max_tn) + 1, 128):
        if cols % c == 0:
            best = c
    return best if best else cols


def _pick_seq_tile(s, target=_KV_TILE_TARGET):
    """KV tile: full S if small, else the largest nice divisor <= target."""
    if s <= target:
        return s
    for step in (128, 8):
        cands = [c for c in range(step, target + 1, step) if s % c == 0]
        if cands:
            return max(cands)
    return s


# ------------------------------ Pallas kernels ------------------------------


def _layer_norm(x, gamma, beta, eps=1e-5):
    # x: (TM, D) f32; gamma/beta: (1, D) f32; biased variance over last dim.
    mean = jnp.mean(x, axis=-1, keepdims=True)
    var = jnp.mean((x - mean) ** 2, axis=-1, keepdims=True)
    inv = jax.lax.rsqrt(var + eps)
    return (x - mean) * inv * gamma + beta


def linear_kernel(x_ref, w_ref, b_ref, o_ref):
    # x (TM, D) bf16, w (D, TN) bf16, b (1, TN) f32 -> f32 accumulation.
    y = jnp.dot(x_ref[...], w_ref[...], preferred_element_type=jnp.float32)
    o_ref[...] = (y + b_ref[...]).astype(o_ref.dtype)


def flash_attention_kernel(q_ref, k_ref, v_ref, o_ref, m_sc, l_sc, acc_sc, *,
                           scale):
    # Blocks: q (1, G, S, Dh), k/v (1, G, TKV, Dh), out (1, S, G*Dh).
    kv = pl.program_id(2)

    @pl.when(kv == 0)
    def _():
        m_sc[...] = jnp.full(m_sc.shape, -jnp.inf, dtype=m_sc.dtype)
        l_sc[...] = jnp.zeros(l_sc.shape, dtype=l_sc.dtype)
        acc_sc[...] = jnp.zeros(acc_sc.shape, dtype=acc_sc.dtype)

    q = q_ref[0]                                   # (G, S, Dh)  bf16
    k = k_ref[0]                                   # (G, TKV, Dh) bf16
    v = v_ref[0]
    s = jnp.einsum("gqd,gkd->gqk", q, k,
                   preferred_element_type=jnp.float32) * scale
    m_prev = m_sc[...]                             # (G, S, 1)
    m_new = jnp.maximum(m_prev, jnp.max(s, axis=-1, keepdims=True))
    alpha = jnp.exp(m_prev - m_new)
    p = jnp.exp(s - m_new)
    l_sc[...] = alpha * l_sc[...] + jnp.sum(p, axis=-1, keepdims=True)
    acc_sc[...] = alpha * acc_sc[...] + jnp.einsum(
        "gqk,gkd->gqd", p.astype(v.dtype), v,
        preferred_element_type=jnp.float32)
    m_sc[...] = m_new

    @pl.when(kv == pl.num_programs(2) - 1)
    def _():
        ctx = acc_sc[...] * pl.reciprocal(l_sc[...], approx=True)   # (G, S, Dh)
        n_g, _, dh = acc_sc.shape
        # Lane-dense head merge: head gi lands at lane offset gi*Dh of the
        # (1, S, G*Dh) output block, so the HBM writeback is full-width.
        for gi in range(n_g):
            o_ref[0, :, gi * dh:(gi + 1) * dh] = ctx[gi].astype(o_ref.dtype)


def encoder_tail_kernel(x_ref, ctx_ref,
                        wo_ref, bo_ref, g1_ref, be1_ref,
                        w1_ref, b1_ref, w2_ref, b2_ref,
                        g2_ref, be2_ref, o_ref):
    # Post-norm TransformerEncoderLayer tail: out-proj + add&LN1 + FFN + add&LN2.
    x = x_ref[...].astype(jnp.float32)                        # bf16 residual -> f32 math
    attn = jnp.dot(ctx_ref[...], wo_ref[...],
                   preferred_element_type=jnp.float32) + bo_ref[...]
    h = _layer_norm(x + attn, g1_ref[...], be1_ref[...])
    ff = jnp.dot(h.astype(jnp.bfloat16), w1_ref[...],
                 preferred_element_type=jnp.float32) + b1_ref[...]
    ff = jnp.maximum(ff, 0.0)                                 # relu
    ff = jnp.dot(ff.astype(jnp.bfloat16), w2_ref[...],
                 preferred_element_type=jnp.float32) + b2_ref[...]
    y = _layer_norm(h + ff, g2_ref[...], be2_ref[...])
    o_ref[...] = y.astype(o_ref.dtype)


# ------------------------------ Pallas wrappers ------------------------------


def pallas_linear(x2d, w, b, out_dtype=jnp.bfloat16):
    """y = x2d @ w + b.

    Grid is (column blocks OUTER, row blocks inner): each weight column block
    is streamed from HBM exactly once while the (much smaller) activation row
    tiles are re-read -- the right order when the weight dominates traffic
    (vocab projection).  Column dims are either full-width or 128-multiples
    (vocab head lane-padded once at init).
    """
    rows, d_in = x2d.shape
    n_out = w.shape[1]

    tm, rows_pad = _row_tiling(rows, _ROW_TILE_TARGET)
    if rows_pad != rows:
        x2d = jnp.pad(x2d, ((0, rows_pad - rows), (0, 0)))
    tn = _pick_col_tile(n_out, d_in, _VMEM_LIMIT)

    # NOTE: the weight block only changes on the outer axis but stays
    # double-buffered: Buffered(1) would expose its DMA once per column block
    # (serializing weight streaming with compute); the tn budget above already
    # accounts for two weight buffers.
    out = pl.pallas_call(
        linear_kernel,
        out_shape=jax.ShapeDtypeStruct((rows_pad, n_out), out_dtype),
        grid_spec=pltpu.PrefetchScalarGridSpec(
            num_scalar_prefetch=0,
            grid=(n_out // tn, rows_pad // tm),       # columns outer, rows inner
            in_specs=[
                pl.BlockSpec((tm, d_in), lambda j, i: (i, 0)),
                pl.BlockSpec((d_in, tn), lambda j, i: (0, j)),
                pl.BlockSpec((1, tn), lambda j, i: (0, j)),
            ],
            out_specs=pl.BlockSpec((tm, tn), lambda j, i: (i, j)),
        ),
        compiler_params=pltpu.CompilerParams(
            dimension_semantics=("parallel", "parallel"),
            vmem_limit_bytes=_VMEM_LIMIT,
        ),
    )(x2d, w, b)
    return out[:rows] if rows_pad != rows else out


def pallas_flash_attention(q, k, v, *, scale):
    """Flash-style attention: q/k/v (B, H, S, Dh) bf16 -> (B, S, H*Dh) bf16."""
    b_sz, n_heads, seq, dh = q.shape
    d_model = n_heads * dh

    # Head group G: smallest divisor of H with G*Dh a multiple of 128 so the
    # output block is lane-dense; fall back to all heads (block == full D).
    group = n_heads
    for g in range(1, n_heads + 1):
        if n_heads % g == 0 and (g * dh) % 128 == 0:
            group = g
            break

    tkv = _pick_seq_tile(seq)
    kern = functools.partial(flash_attention_kernel, scale=scale)

    return pl.pallas_call(
        kern,
        out_shape=jax.ShapeDtypeStruct((b_sz, seq, d_model), jnp.bfloat16),
        grid_spec=pltpu.PrefetchScalarGridSpec(
            num_scalar_prefetch=0,
            grid=(b_sz, n_heads // group, seq // tkv),
            in_specs=[
                pl.BlockSpec((1, group, seq, dh), lambda b, g, kv: (b, g, 0, 0)),
                pl.BlockSpec((1, group, tkv, dh), lambda b, g, kv: (b, g, kv, 0)),
                pl.BlockSpec((1, group, tkv, dh), lambda b, g, kv: (b, g, kv, 0)),
            ],
            out_specs=pl.BlockSpec((1, seq, group * dh),
                                   lambda b, g, kv: (b, 0, g)),
            scratch_shapes=[
                pltpu.VMEM((group, seq, 1), jnp.float32),    # running max
                pltpu.VMEM((group, seq, 1), jnp.float32),    # running denominator
                pltpu.VMEM((group, seq, dh), jnp.float32),   # running numerator
            ],
        ),
        compiler_params=pltpu.CompilerParams(
            dimension_semantics=("parallel", "parallel", "arbitrary"),
            vmem_limit_bytes=_VMEM_LIMIT,
        ),
    )(q, k, v)


def run_encoder_tail(x_rows, ctx_rows, lp):
    """Fused out-proj + add&LN1 + FFN(relu) + add&LN2, row-tiled."""
    rows, d_model = x_rows.shape
    d_ff = lp["w1"].shape[1]

    # Row-tile budget: resident weights (single- or double-buffered) plus row
    # tiles plus the (tm, d_ff) f32 relu intermediate must fit _VMEM_LIMIT.
    buf = 1 if _SINGLE_BUFFER_OK else 2
    resident = buf * 2 * (d_model * d_model + 2 * d_model * d_ff)   # bf16 weights
    per_row = 12 * d_model + 4 * d_ff + 16 * d_model                # bytes / row
    budget = max(_VMEM_LIMIT - resident - (4 << 20), 1 << 20)
    tm_cap = max(8, budget // per_row)
    # TODO(synk): for very large d_ff on v7x, additionally tile the FFN over
    # d_ff (grid axis + accumulator scratch) instead of keeping w1/w2 resident.
    tm, rows_pad = _row_tiling(rows, min(tm_cap, _ROW_TILE_TARGET))
    if rows_pad != rows:
        pad = ((0, rows_pad - rows), (0, 0))
        x_rows = jnp.pad(x_rows, pad)
        ctx_rows = jnp.pad(ctx_rows, pad)

    def _row(shape):
        return pl.BlockSpec(shape, lambda i: (i, 0))

    out = pl.pallas_call(
        encoder_tail_kernel,
        out_shape=jax.ShapeDtypeStruct((rows_pad, d_model), jnp.bfloat16),
        grid_spec=pltpu.PrefetchScalarGridSpec(
            num_scalar_prefetch=0,
            grid=(rows_pad // tm,),
            in_specs=[
                _row((tm, d_model)),                                  # x residual
                _row((tm, d_model)),                                  # attention ctx
                _const_spec((d_model, d_model), lambda i: (0, 0)),    # wo
                _const_spec((1, d_model), lambda i: (0, 0)),          # bo
                _const_spec((1, d_model), lambda i: (0, 0)),          # ln1 gamma
                _const_spec((1, d_model), lambda i: (0, 0)),          # ln1 beta
                _const_spec((d_model, d_ff), lambda i: (0, 0)),       # w1
                _const_spec((1, d_ff), lambda i: (0, 0)),             # b1
                _const_spec((d_ff, d_model), lambda i: (0, 0)),       # w2
                _const_spec((1, d_model), lambda i: (0, 0)),          # b2
                _const_spec((1, d_model), lambda i: (0, 0)),          # ln2 gamma
                _const_spec((1, d_model), lambda i: (0, 0)),          # ln2 beta
            ],
            out_specs=_row((tm, d_model)),
        ),
        compiler_params=pltpu.CompilerParams(
            dimension_semantics=("parallel",),
            vmem_limit_bytes=_VMEM_LIMIT,
        ),
    )(x_rows, ctx_rows, lp["wo"], lp["bo"], lp["ln1_g"], lp["ln1_b"],
      lp["w1"], lp["b1"], lp["w2"], lp["b2"], lp["ln2_g"], lp["ln2_b"])
    return out[:rows] if rows_pad != rows else out


# -------------------------------- model setup --------------------------------


def make_positional_encoding(max_len, embedding_dim):
    # Matches the PyTorch PositionalEncoding buffer (sin on even, cos on odd).
    position = np.arange(0, max_len, dtype=np.float32)[:, None]
    div_term = np.exp(
        np.arange(0, embedding_dim, 2, dtype=np.float32)
        * (-math.log(10000.0) / embedding_dim))
    pe = np.zeros((max_len, embedding_dim), dtype=np.float32)
    pe[:, 0::2] = np.sin(position * div_term)
    pe[:, 1::2] = np.cos(position * div_term)
    return jnp.asarray(pe)  # (max_len, D)


def init_params(key, vocab_size, embedding_dim, dim_feedforward, num_layers,
                pad_idx):
    D, F, V = embedding_dim, dim_feedforward, vocab_size
    keys = jax.random.split(key, 2 + num_layers)

    def dense(k, shape, scale=0.02, dtype=jnp.bfloat16):
        # Matmul weights stored pre-transposed (in, out) in bf16 for the MXU.
        return (scale * jax.random.normal(k, shape)).astype(dtype)

    emb = dense(keys[0], (V, D), scale=1.0, dtype=jnp.float32)
    emb = emb.at[pad_idx].set(0.0)  # padding_idx row is zero

    layers = []
    for li in range(num_layers):
        lk = jax.random.split(keys[2 + li], 4)
        layers.append(dict(
            wqkv=dense(lk[0], (D, 3 * D)),
            bqkv=jnp.zeros((1, 3 * D), jnp.float32),
            wo=dense(lk[1], (D, D)),
            bo=jnp.zeros((1, D), jnp.float32),
            ln1_g=jnp.ones((1, D), jnp.float32),
            ln1_b=jnp.zeros((1, D), jnp.float32),
            w1=dense(lk[2], (D, F)),
            b1=jnp.zeros((1, F), jnp.float32),
            w2=dense(lk[3], (F, D)),
            b2=jnp.zeros((1, D), jnp.float32),
            ln2_g=jnp.ones((1, D), jnp.float32),
            ln2_b=jnp.zeros((1, D), jnp.float32),
        ))

    # Vocab head pre-padded to a 128-lane multiple once at init (review: no
    # per-call jnp.pad of the (D, V) weight inside the jitted forward).
    v_pad = _round_up(V, 128)
    w_out = jnp.zeros((D, v_pad), jnp.bfloat16).at[:, :V].set(
        dense(keys[1], (D, V)))
    b_out = jnp.zeros((1, v_pad), jnp.float32)
    return dict(embedding=emb, layers=layers, w_out=w_out, b_out=b_out)


def mlm_transformer_forward(params, tokens, pe, *, num_heads, vocab_size):
    # tokens: (B, S) int32
    D = params["embedding"].shape[1]
    B, S = tokens.shape
    H = num_heads
    Dh = D // H
    R = B * S
    scale = 1.0 / math.sqrt(Dh)

    # Embedding gather + scale + positional encoding (plain-JAX glue); the
    # activation stream then lives in bf16 (f32 math happens inside kernels).
    emb = jnp.take(params["embedding"], tokens, axis=0) * math.sqrt(D)
    x = (emb + pe[None, :S, :]).astype(jnp.bfloat16)            # (B, S, D)
    # dropout -> identity (inference semantics)

    for lp in params["layers"]:
        x_rows = x.reshape(R, D)
        qkv = pallas_linear(x_rows, lp["wqkv"], lp["bqkv"])      # (R, 3D) bf16
        # One bf16 head-split transpose; the ctx head-merge transpose is gone
        # because the attention kernel writes a lane-dense (B, S, D) output.
        qkv = jnp.transpose(qkv.reshape(B, S, 3, H, Dh), (2, 0, 3, 1, 4))
        ctx = pallas_flash_attention(qkv[0], qkv[1], qkv[2], scale=scale)
        x = run_encoder_tail(x_rows, ctx.reshape(R, D), lp).reshape(B, S, D)

    logits = pallas_linear(x.reshape(R, D), params["w_out"], params["b_out"],
                           out_dtype=jnp.float32)                # (R, V_pad)
    return logits.reshape(B, S, -1)[:, :, :vocab_size]           # (B, S, V)


if __name__ == "__main__":
    vocab_size = 64
    embedding_dim = 32
    dim_feedforward = 64
    num_layers = 2
    num_heads = 4
    pad_idx = 0
    batch, seq_len = 2, 8
    max_seq_len = 128

    key = jax.random.PRNGKey(0)
    k_params, k_tokens = jax.random.split(key)

    params = init_params(k_params, vocab_size, embedding_dim, dim_feedforward,
                         num_layers, pad_idx)
    pe = make_positional_encoding(max_seq_len, embedding_dim)
    tokens = jax.random.randint(k_tokens, (batch, seq_len), minval=0,
                                maxval=vocab_size, dtype=jnp.int32)

    fwd = jax.jit(functools.partial(mlm_transformer_forward,
                                    num_heads=num_heads,
                                    vocab_size=vocab_size))
    logits = jax.block_until_ready(fwd(params, tokens, pe))

    assert logits.shape == (batch, seq_len, vocab_size), logits.shape
    assert bool(jnp.all(jnp.isfinite(logits)))
    print("KERNEL_OK")
</pallas_src>

<mosaic_0001>
module attributes {stable_mosaic.version = 11 : i64} {
  func.func @_copy(%arg0: i32, %arg1: memref<8x128xf32, #tpu.memory_space<vmem>>, %arg2: memref<8x128xf32, #tpu.memory_space<vmem>>) attributes {dimension_semantics = [#tpu.dimension_semantics<arbitrary>], iteration_bounds = array<i64: 2>, scalar_prefetch = 0 : i64, scratch_operands = 0 : i64, tpu.core_type = #tpu.core_type<tc>, window_params = [{pipeline_mode = #tpu.pipeline_mode<synchronous>, transform_indices = @transform_0, window_bounds = array<i64: 8, 128>}, {pipeline_mode = #tpu.pipeline_mode<synchronous>, transform_indices = @transform_1, window_bounds = array<i64: 8, 128>}]} {
    %c0 = arith.constant 0 : index
    %c0_0 = arith.constant 0 : index
    %0 = vector.load %arg1[%c0, %c0_0] : memref<8x128xf32, #tpu.memory_space<vmem>>, vector<8x128xf32>
    %c0_1 = arith.constant 0 : index
    %c0_2 = arith.constant 0 : index
    %1 = vector.load %arg2[%c0_1, %c0_2] : memref<8x128xf32, #tpu.memory_space<vmem>>, vector<8x128xf32>
    tpu.vector_store %arg2[%c0_1, %c0_2], %0 {strides = array<i32>} : memref<8x128xf32, #tpu.memory_space<vmem>>, vector<8x128xf32>,
    return
  }
  func.func @transform_0(%arg0: i32) -> (i32, i32) {
    %c0_i32 = arith.constant 0 : i32
    %c0_i32_0 = arith.constant 0 : i32
    %c0_i32_1 = arith.constant 0 : i32
    return %c0_i32, %c0_i32_0 : i32, i32
  }
  func.func @transform_1(%arg0: i32) -> (i32, i32) {
    %c0_i32 = arith.constant 0 : i32
    %c0_i32_0 = arith.constant 0 : i32
    %c0_i32_1 = arith.constant 0 : i32
    return %c0_i32, %c0_i32_0 : i32, i32
  }
}

module attributes {stable_mosaic.version = 11 : i64} {
  func.func @flash_attention_kernel(%arg0: i32, %arg1: i32, %arg2: i32, %arg3: memref<1x4x8x8xbf16, #tpu.memory_space<vmem>>, %arg4: memref<1x4x8x8xbf16, #tpu.memory_space<vmem>>, %arg5: memref<1x4x8x8xbf16, #tpu.memory_space<vmem>>, %arg6: memref<1x8x32xbf16, #tpu.memory_space<vmem>>, %arg7: memref<4x8x1xf32, #tpu.memory_space<vmem>>, %arg8: memref<4x8x1xf32, #tpu.memory_space<vmem>>, %arg9: memref<4x8x8xf32, #tpu.memory_space<vmem>>) attributes {dimension_semantics = [#tpu.dimension_semantics<parallel>, #tpu.dimension_semantics<parallel>, #tpu.dimension_semantics<arbitrary>], iteration_bounds = array<i64: 2, 1, 1>, scalar_prefetch = 0 : i64, scratch_operands = 3 : i64, tpu.core_type = #tpu.core_type<tc>, window_params = [{transform_indices = @transform_0, window_bounds = array<i64: 1, 4, 8, 8>}, {transform_indices = @transform_1, window_bounds = array<i64: 1, 4, 8, 8>}, {transform_indices = @transform_2, window_bounds = array<i64: 1, 4, 8, 8>}, {transform_indices = @transform_3, window_bounds = array<i64: 1, 8, 32>}]} {
    %c0_i32 = arith.constant 0 : i32
    %0 = arith.cmpi eq, %arg2, %c0_i32 : i32
    %1 = arith.extui %0 : i1 to i32
    %c0_i32_0 = arith.constant 0 : i32
    %2 = arith.cmpi ne, %1, %c0_i32_0 : i32
    scf.if %2 {
      %cst_36 = arith.constant 0xFF800000 : f32
      %38 = vector.broadcast %cst_36 : f32 to vector<4x8x1xf32>
      %c0_37 = arith.constant 0 : index
      %c0_38 = arith.constant 0 : index
      %c0_39 = arith.constant 0 : index
      %39 = vector.load %arg7[%c0_37, %c0_38, %c0_39] : memref<4x8x1xf32, #tpu.memory_space<vmem>>, vector<4x8x1xf32>
      tpu.vector_store %arg7[%c0_37, %c0_38, %c0_39], %38 {strides = array<i32>} : memref<4x8x1xf32, #tpu.memory_space<vmem>>, vector<4x8x1xf32>,
      %cst_40 = arith.constant 0.000000e+00 : f32
      %40 = vector.broadcast %cst_40 : f32 to vector<4x8x1xf32>
      %c0_41 = arith.constant 0 : index
      %c0_42 = arith.constant 0 : index
      %c0_43 = arith.constant 0 : index
      %41 = vector.load %arg8[%c0_41, %c0_42, %c0_43] : memref<4x8x1xf32, #tpu.memory_space<vmem>>, vector<4x8x1xf32>
      tpu.vector_store %arg8[%c0_41, %c0_42, %c0_43], %40 {strides = array<i32>} : memref<4x8x1xf32, #tpu.memory_space<vmem>>, vector<4x8x1xf32>,
      %cst_44 = arith.constant 0.000000e+00 : f32
      %42 = vector.broadcast %cst_44 : f32 to vector<4x8x8xf32>
      %c0_45 = arith.constant 0 : index
      %c0_46 = arith.constant 0 : index
      %c0_47 = arith.constant 0 : index
      %43 = vector.load %arg9[%c0_45, %c0_46, %c0_47] : memref<4x8x8xf32, #tpu.memory_space<vmem>>, vector<4x8x8xf32>
      tpu.vector_store %arg9[%c0_45, %c0_46, %c0_47], %42 {strides = array<i32>} : memref<4x8x8xf32, #tpu.memory_space<vmem>>, vector<4x8x8xf32>,
    } else {
    }
    %c0 = arith.constant 0 : index
    %c0_1 = arith.constant 0 : index
    %c0_2 = arith.constant 0 : index
    %c0_3 = arith.constant 0 : index
    %3 = vector.load %arg3[%c0, %c0_1, %c0_2, %c0_3] : memref<1x4x8x8xbf16, #tpu.memory_space<vmem>>, vector<1x4x8x8xbf16>
    %4 = vector.shape_cast %3 : vector<1x4x8x8xbf16> to vector<4x8x8xbf16>
    %c0_4 = arith.constant 0 : index
    %c0_5 = arith.constant 0 : index
    %c0_6 = arith.constant 0 : index
    %c0_7 = arith.constant 0 : index
    %5 = vector.load %arg4[%c0_4, %c0_5, %c0_6, %c0_7] : memref<1x4x8x8xbf16, #tpu.memory_space<vmem>>, vector<1x4x8x8xbf16>
    %6 = vector.shape_cast %5 : vector<1x4x8x8xbf16> to vector<4x8x8xbf16>
    %c0_8 = arith.constant 0 : index
    %c0_9 = arith.constant 0 : index
    %c0_10 = arith.constant 0 : index
    %c0_11 = arith.constant 0 : index
    %7 = vector.load %arg5[%c0_8, %c0_9, %c0_10, %c0_11] : memref<1x4x8x8xbf16, #tpu.memory_space<vmem>>, vector<1x4x8x8xbf16>
    %8 = vector.shape_cast %7 : vector<1x4x8x8xbf16> to vector<4x8x8xbf16>
    "tpu.trace_start"() <{level = 10 : i32, message = "gqd,gkd->gqk"}> : () -> ()
    %cst = arith.constant dense<0.000000e+00> : vector<4x8x8xf32>
    %9 = tpu.matmul %4, %6, %cst {dimension_numbers = #tpu.dot_dimension_numbers<[2], [2], [1], [1], [0, 0, 0, 1, 1, 1], [0], [0]>} : vector<4x8x8xbf16>, vector<4x8x8xbf16>, vector<4x8x8xf32> -> vector<4x8x8xf32>
    "tpu.trace_stop"() : () -> ()
    %cst_12 = arith.constant 0.353553385 : f32
    %10 = vector.broadcast %cst_12 : f32 to vector<4x8x8xf32>
    %11 = arith.mulf %9, %10 : vector<4x8x8xf32>
    %c0_13 = arith.constant 0 : index
    %c0_14 = arith.constant 0 : index
    %c0_15 = arith.constant 0 : index
    %12 = vector.load %arg7[%c0_13, %c0_14, %c0_15] : memref<4x8x1xf32, #tpu.memory_space<vmem>>, vector<4x8x1xf32>
    %cst_16 = arith.constant dense<0xFF800000> : vector<4x8xf32>
    %13 = vector.multi_reduction <maximumf>, %11, %cst_16 [2] : vector<4x8x8xf32> to vector<4x8xf32>
    %14 = vector.shape_cast %13 : vector<4x8xf32> to vector<4x8x1xf32>
    %15 = arith.maximumf %12, %14 : vector<4x8x1xf32>
    %16 = arith.subf %12, %15 : vector<4x8x1xf32>
    %17 = math.exp %16 : vector<4x8x1xf32>
    %18 = vector.broadcast %15 : vector<4x8x1xf32> to vector<4x8x8xf32>
    %19 = arith.subf %11, %18 : vector<4x8x8xf32>
    %20 = math.exp %19 : vector<4x8x8xf32>
    %c0_17 = arith.constant 0 : index
    %c0_18 = arith.constant 0 : index
    %c0_19 = arith.constant 0 : index
    %21 = vector.load %arg8[%c0_17, %c0_18, %c0_19] : memref<4x8x1xf32, #tpu.memory_space<vmem>>, vector<4x8x1xf32>
    %22 = arith.mulf %17, %21 : vector<4x8x1xf32>
    %cst_20 = arith.constant dense<0.000000e+00> : vector<4x8xf32>
    %23 = vector.multi_reduction <add>, %20, %cst_20 [2] : vector<4x8x8xf32> to vector<4x8xf32>
    %24 = vector.shape_cast %23 : vector<4x8xf32> to vector<4x8x1xf32>
    %25 = arith.addf %22, %24 : vector<4x8x1xf32>
    %c0_21 = arith.constant 0 : index
    %c0_22 = arith.constant 0 : index
    %c0_23 = arith.constant 0 : index
    %26 = vector.load %arg8[%c0_21, %c0_22, %c0_23] : memref<4x8x1xf32, #tpu.memory_space<vmem>>, vector<4x8x1xf32>
    tpu.vector_store %arg8[%c0_21, %c0_22, %c0_23], %25 {strides = array<i32>} : memref<4x8x1xf32, #tpu.memory_space<vmem>>, vector<4x8x1xf32>,
    %c0_24 = arith.constant 0 : index
    %c0_25 = arith.constant 0 : index
    %c0_26 = arith.constant 0 : index
    %27 = vector.load %arg9[%c0_24, %c0_25, %c0_26] : memref<4x8x8xf32, #tpu.memory_space<vmem>>, vector<4x8x8xf32>
    %28 = vector.broadcast %17 : vector<4x8x1xf32> to vector<4x8x8xf32>
    %29 = arith.mulf %28, %27 : vector<4x8x8xf32>
    %30 = arith.truncf %20 : vector<4x8x8xf32> to vector<4x8x8xbf16>
    "tpu.trace_start"() <{level = 10 : i32, message = "gqk,gkd->gqd"}> : () -> ()
    %cst_27 = arith.constant dense<0.000000e+00> : vector<4x8x8xf32>
    %31 = tpu.matmul %30, %8, %cst_27 {dimension_numbers = #tpu.dot_dimension_numbers<[2], [1], [1], [2], [0, 0, 0, 1, 1, 2], [0], [0]>} : vector<4x8x8xbf16>, vector<4x8x8xbf16>, vector<4x8x8xf32> -> vector<4x8x8xf32>
    "tpu.trace_stop"() : () -> ()
    %32 = arith.addf %29, %31 : vector<4x8x8xf32>
    %c0_28 = arith.constant 0 : index
    %c0_29 = arith.constant 0 : index
    %c0_30 = arith.constant 0 : index
    %33 = vector.load %arg9[%c0_28, %c0_29, %c0_30] : memref<4x8x8xf32, #tpu.memory_space<vmem>>, vector<4x8x8xf32>
    tpu.vector_store %arg9[%c0_28, %c0_29, %c0_30], %32 {strides = array<i32>} : memref<4x8x8xf32, #tpu.memory_space<vmem>>, vector<4x8x8xf32>,
    %c0_31 = arith.constant 0 : index
    %c0_32 = arith.constant 0 : index
    %c0_33 = arith.constant 0 : index
    %34 = vector.load %arg7[%c0_31, %c0_32, %c0_33] : memref<4x8x1xf32, #tpu.memory_space<vmem>>, vector<4x8x1xf32>
    tpu.vector_store %arg7[%c0_31, %c0_32, %c0_33], %15 {strides = array<i32>} : memref<4x8x1xf32, #tpu.memory_space<vmem>>, vector<4x8x1xf32>,
    %c0_i32_34 = arith.constant 0 : i32
    %35 = arith.cmpi eq, %arg2, %c0_i32_34 : i32
    %36 = arith.extui %35 : i1 to i32
    %c0_i32_35 = arith.constant 0 : i32
    %37 = arith.cmpi ne, %36, %c0_i32_35 : i32
    scf.if %37 {
      %c0_36 = arith.constant 0 : index
      %c0_37 = arith.constant 0 : index
      %c0_38 = arith.constant 0 : index
      %38 = vector.load %arg9[%c0_36, %c0_37, %c0_38] : memref<4x8x8xf32, #tpu.memory_space<vmem>>, vector<4x8x8xf32>
      %c0_39 = arith.constant 0 : index
      %c0_40 = arith.constant 0 : index
      %c0_41 = arith.constant 0 : index
      %39 = vector.load %arg8[%c0_39, %c0_40, %c0_41] : memref<4x8x1xf32, #tpu.memory_space<vmem>>, vector<4x8x1xf32>
      %40 = tpu.reciprocal %39 {approx = true} : vector<4x8x1xf32> -> vector<4x8x1xf32>
      %41 = vector.broadcast %40 : vector<4x8x1xf32> to vector<4x8x8xf32>
      %42 = arith.mulf %38, %41 : vector<4x8x8xf32>
      %43 = vector.extract_strided_slice %42 {offsets = [0, 0, 0], sizes = [1, 8, 8], strides = [1, 1, 1]} : vector<4x8x8xf32> to vector<1x8x8xf32>
      %44 = vector.shape_cast %43 : vector<1x8x8xf32> to vector<8x8xf32>
      %45 = arith.truncf %44 : vector<8x8xf32> to vector<8x8xbf16>
      %c0_42 = arith.constant 0 : index
      %c0_43 = arith.constant 0 : index
      %c0_44 = arith.constant 0 : index
      %46 = vector.load %arg6[%c0_42, %c0_43, %c0_44] : memref<1x8x32xbf16, #tpu.memory_space<vmem>>, vector<1x8x8xbf16>
      %47 = vector.shape_cast %46 : vector<1x8x8xbf16> to vector<8x8xbf16>
      %48 = vector.shape_cast %45 : vector<8x8xbf16> to vector<1x8x8xbf16>
      tpu.vector_store %arg6[%c0_42, %c0_43, %c0_44], %48 {strides = array<i32>} : memref<1x8x32xbf16, #tpu.memory_space<vmem>>, vector<1x8x8xbf16>,
      %49 = vector.extract_strided_slice %42 {offsets = [1, 0, 0], sizes = [1, 8, 8], strides = [1, 1, 1]} : vector<4x8x8xf32> to vector<1x8x8xf32>
      %50 = vector.shape_cast %49 : vector<1x8x8xf32> to vector<8x8xf32>
      %51 = arith.truncf %50 : vector<8x8xf32> to vector<8x8xbf16>
      %c0_45 = arith.constant 0 : index
      %c0_46 = arith.constant 0 : index
      %c8 = arith.constant 8 : index
      %52 = vector.load %arg6[%c0_45, %c0_46, %c8] : memref<1x8x32xbf16, #tpu.memory_space<vmem>>, vector<1x8x8xbf16>
      %53 = vector.shape_cast %52 : vector<1x8x8xbf16> to vector<8x8xbf16>
      %54 = vector.shape_cast %51 : vector<8x8xbf16> to vector<1x8x8xbf16>
      tpu.vector_store %arg6[%c0_45, %c0_46, %c8], %54 {strides = array<i32>} : memref<1x8x32xbf16, #tpu.memory_space<vmem>>, vector<1x8x8xbf16>,
      %55 = vector.extract_strided_slice %42 {offsets = [2, 0, 0], sizes = [1, 8, 8], strides = [1, 1, 1]} : vector<4x8x8xf32> to vector<1x8x8xf32>
      %56 = vector.shape_cast %55 : vector<1x8x8xf32> to vector<8x8xf32>
      %57 = arith.truncf %56 : vector<8x8xf32> to vector<8x8xbf16>
      %c0_47 = arith.constant 0 : index
      %c0_48 = arith.constant 0 : index
      %c16 = arith.constant 16 : index
      %58 = vector.load %arg6[%c0_47, %c0_48, %c16] : memref<1x8x32xbf16, #tpu.memory_space<vmem>>, vector<1x8x8xbf16>
      %59 = vector.shape_cast %58 : vector<1x8x8xbf16> to vector<8x8xbf16>
      %60 = vector.shape_cast %57 : vector<8x8xbf16> to vector<1x8x8xbf16>
      tpu.vector_store %arg6[%c0_47, %c0_48, %c16], %60 {strides = array<i32>} : memref<1x8x32xbf16, #tpu.memory_space<vmem>>, vector<1x8x8xbf16>,
      %61 = vector.extract_strided_slice %42 {offsets = [3, 0, 0], sizes = [1, 8, 8], strides = [1, 1, 1]} : vector<4x8x8xf32> to vector<1x8x8xf32>
      %62 = vector.shape_cast %61 : vector<1x8x8xf32> to vector<8x8xf32>
      %63 = arith.truncf %62 : vector<8x8xf32> to vector<8x8xbf16>
      %c0_49 = arith.constant 0 : index
      %c0_50 = arith.constant 0 : index
      %c24 = arith.constant 24 : index
      %64 = vector.load %arg6[%c0_49, %c0_50, %c24] : memref<1x8x32xbf16, #tpu.memory_space<vmem>>, vector<1x8x8xbf16>
      %65 = vector.shape_cast %64 : vector<1x8x8xbf16> to vector<8x8xbf16>
      %66 = vector.shape_cast %63 : vector<8x8xbf16> to vector<1x8x8xbf16>
      tpu.vector_store %arg6[%c0_49, %c0_50, %c24], %66 {strides = array<i32>} : memref<1x8x32xbf16, #tpu.memory_space<vmem>>, vector<1x8x8xbf16>,
    } else {
    }
    return
  }
  func.func @transform_0(%arg0: i32, %arg1: i32, %arg2: i32) -> (i32, i32, i32, i32) {
    %c0_i32 = arith.constant 0 : i32
    %c0_i32_0 = arith.constant 0 : i32
    %c0_i32_1 = arith.constant 0 : i32
    return %arg0, %arg1, %c0_i32, %c0_i32_0 : i32, i32, i32, i32
  }
  func.func @transform_1(%arg0: i32, %arg1: i32, %arg2: i32) -> (i32, i32, i32, i32) {
    %c0_i32 = arith.constant 0 : i32
    %c0_i32_0 = arith.constant 0 : i32
    return %arg0, %arg1, %arg2, %c0_i32 : i32, i32, i32, i32
  }
  func.func @transform_2(%arg0: i32, %arg1: i32, %arg2: i32) -> (i32, i32, i32, i32) {
    %c0_i32 = arith.constant 0 : i32
    %c0_i32_0 = arith.constant 0 : i32
    return %arg0, %arg1, %arg2, %c0_i32 : i32, i32, i32, i32
  }
  func.func @transform_3(%arg0: i32, %arg1: i32, %arg2: i32) -> (i32, i32, i32) {
    %c0_i32 = arith.constant 0 : i32
    %c0_i32_0 = arith.constant 0 : i32
    return %arg0, %c0_i32, %arg1 : i32, i32, i32
  }
}

module attributes {stable_mosaic.version = 11 : i64} {
  func.func @linear_kernel(%arg0: i32, %arg1: i32, %arg2: memref<16x32xbf16, #tpu.memory_space<vmem>>, %arg3: memref<32x96xbf16, #tpu.memory_space<vmem>>, %arg4: memref<1x96xf32, #tpu.memory_space<vmem>>, %arg5: memref<16x96xbf16, #tpu.memory_space<vmem>>) attributes {dimension_semantics = [#tpu.dimension_semantics<parallel>, #tpu.dimension_semantics<parallel>], iteration_bounds = array<i64: 1, 1>, scalar_prefetch = 0 : i64, scratch_operands = 0 : i64, tpu.core_type = #tpu.core_type<tc>, window_params = [{transform_indices = @transform_0, window_bounds = array<i64: 16, 32>}, {transform_indices = @transform_1, window_bounds = array<i64: 32, 96>}, {transform_indices = @transform_2, window_bounds = array<i64: 1, 96>}, {transform_indices = @transform_3, window_bounds = array<i64: 16, 96>}]} {
    %c0 = arith.constant 0 : index
    %c0_0 = arith.constant 0 : index
    %0 = vector.load %arg2[%c0, %c0_0] : memref<16x32xbf16, #tpu.memory_space<vmem>>, vector<16x32xbf16>
    %c0_1 = arith.constant 0 : index
    %c0_2 = arith.constant 0 : index
    %1 = vector.load %arg3[%c0_1, %c0_2] : memref<32x96xbf16, #tpu.memory_space<vmem>>, vector<32x96xbf16>
    %cst = arith.constant dense<0.000000e+00> : vector<16x96xf32>
    %2 = tpu.matmul %0, %1, %cst {dimension_numbers = #tpu.dot_dimension_numbers<[1], [0], [0], [1], [0, 0, 1, 1], [], []>} : vector<16x32xbf16>, vector<32x96xbf16>, vector<16x96xf32> -> vector<16x96xf32>
    %c0_3 = arith.constant 0 : index
    %c0_4 = arith.constant 0 : index
    %3 = vector.load %arg4[%c0_3, %c0_4] : memref<1x96xf32, #tpu.memory_space<vmem>>, vector<1x96xf32>
    %4 = vector.broadcast %3 : vector<1x96xf32> to vector<16x96xf32>
    %5 = arith.addf %2, %4 : vector<16x96xf32>
    %6 = arith.truncf %5 : vector<16x96xf32> to vector<16x96xbf16>
    %c0_5 = arith.constant 0 : index
    %c0_6 = arith.constant 0 : index
    %7 = vector.load %arg5[%c0_5, %c0_6] : memref<16x96xbf16, #tpu.memory_space<vmem>>, vector<16x96xbf16>
    tpu.vector_store %arg5[%c0_5, %c0_6], %6 {strides = array<i32>} : memref<16x96xbf16, #tpu.memory_space<vmem>>, vector<16x96xbf16>,
    return
  }
  func.func @transform_0(%arg0: i32, %arg1: i32) -> (i32, i32) {
    %c0_i32 = arith.constant 0 : i32
    %c0_i32_0 = arith.constant 0 : i32
    return %arg1, %c0_i32 : i32, i32
  }
  func.func @transform_1(%arg0: i32, %arg1: i32) -> (i32, i32) {
    %c0_i32 = arith.constant 0 : i32
    %c0_i32_0 = arith.constant 0 : i32
    return %c0_i32, %arg0 : i32, i32
  }
  func.func @transform_2(%arg0: i32, %arg1: i32) -> (i32, i32) {
    %c0_i32 = arith.constant 0 : i32
    %c0_i32_0 = arith.constant 0 : i32
    return %c0_i32, %arg0 : i32, i32
  }
  func.func @transform_3(%arg0: i32, %arg1: i32) -> (i32, i32) {
    %c0_i32 = arith.constant 0 : i32
    return %arg1, %arg0 : i32, i32
  }
}

module attributes {stable_mosaic.version = 11 : i64} {
  func.func @encoder_tail_kernel(%arg0: i32, %arg1: memref<16x32xbf16, #tpu.memory_space<vmem>>, %arg2: memref<16x32xbf16, #tpu.memory_space<vmem>>, %arg3: memref<32x32xbf16, #tpu.memory_space<vmem>>, %arg4: memref<1x32xf32, #tpu.memory_space<vmem>>, %arg5: memref<1x32xf32, #tpu.memory_space<vmem>>, %arg6: memref<1x32xf32, #tpu.memory_space<vmem>>, %arg7: memref<32x64xbf16, #tpu.memory_space<vmem>>, %arg8: memref<1x64xf32, #tpu.memory_space<vmem>>, %arg9: memref<64x32xbf16, #tpu.memory_space<vmem>>, %arg10: memref<1x32xf32, #tpu.memory_space<vmem>>, %arg11: memref<1x32xf32, #tpu.memory_space<vmem>>, %arg12: memref<1x32xf32, #tpu.memory_space<vmem>>, %arg13: memref<16x32xbf16, #tpu.memory_space<vmem>>) attributes {dimension_semantics = [#tpu.dimension_semantics<parallel>], iteration_bounds = array<i64: 1>, scalar_prefetch = 0 : i64, scratch_operands = 0 : i64, tpu.core_type = #tpu.core_type<tc>, window_params = [{transform_indices = @transform_0, window_bounds = array<i64: 16, 32>}, {transform_indices = @transform_1, window_bounds = array<i64: 16, 32>}, {pipeline_mode = #tpu.pipeline_mode<synchronous>, transform_indices = @transform_2, window_bounds = array<i64: 32, 32>}, {pipeline_mode = #tpu.pipeline_mode<synchronous>, transform_indices = @transform_3, window_bounds = array<i64: 1, 32>}, {pipeline_mode = #tpu.pipeline_mode<synchronous>, transform_indices = @transform_4, window_bounds = array<i64: 1, 32>}, {pipeline_mode = #tpu.pipeline_mode<synchronous>, transform_indices = @transform_5, window_bounds = array<i64: 1, 32>}, {pipeline_mode = #tpu.pipeline_mode<synchronous>, transform_indices = @transform_6, window_bounds = array<i64: 32, 64>}, {pipeline_mode = #tpu.pipeline_mode<synchronous>, transform_indices = @transform_7, window_bounds = array<i64: 1, 64>}, {pipeline_mode = #tpu.pipeline_mode<synchronous>, transform_indices = @transform_8, window_bounds = array<i64: 64, 32>}, {pipeline_mode = #tpu.pipeline_mode<synchronous>, transform_indices = @transform_9, window_bounds = array<i64: 1, 32>}, {pipeline_mode = #tpu.pipeline_mode<synchronous>, transform_indices = @transform_10, window_bounds = array<i64: 1, 32>}, {pipeline_mode = #tpu.pipeline_mode<synchronous>, transform_indices = @transform_11, window_bounds = array<i64: 1, 32>}, {transform_indices = @transform_12, window_bounds = array<i64: 16, 32>}]} {
    %c0 = arith.constant 0 : index
    %c0_0 = arith.constant 0 : index
    %0 = vector.load %arg1[%c0, %c0_0] : memref<16x32xbf16, #tpu.memory_space<vmem>>, vector<16x32xbf16>
    %1 = arith.extf %0 : vector<16x32xbf16> to vector<16x32xf32>
    %c0_1 = arith.constant 0 : index
    %c0_2 = arith.constant 0 : index
    %2 = vector.load %arg2[%c0_1, %c0_2] : memref<16x32xbf16, #tpu.memory_space<vmem>>, vector<16x32xbf16>
    %c0_3 = arith.constant 0 : index
    %c0_4 = arith.constant 0 : index
    %3 = vector.load %arg3[%c0_3, %c0_4] : memref<32x32xbf16, #tpu.memory_space<vmem>>, vector<32x32xbf16>
    %cst = arith.constant dense<0.000000e+00> : vector<16x32xf32>
    %4 = tpu.matmul %2, %3, %cst {dimension_numbers = #tpu.dot_dimension_numbers<[1], [0], [0], [1], [0, 0, 1, 1], [], []>} : vector<16x32xbf16>, vector<32x32xbf16>, vector<16x32xf32> -> vector<16x32xf32>
    %c0_5 = arith.constant 0 : index
    %c0_6 = arith.constant 0 : index
    %5 = vector.load %arg4[%c0_5, %c0_6] : memref<1x32xf32, #tpu.memory_space<vmem>>, vector<1x32xf32>
    %6 = vector.broadcast %5 : vector<1x32xf32> to vector<16x32xf32>
    %7 = arith.addf %4, %6 : vector<16x32xf32>
    %8 = arith.addf %1, %7 : vector<16x32xf32>
    %c0_7 = arith.constant 0 : index
    %c0_8 = arith.constant 0 : index
    %9 = vector.load %arg5[%c0_7, %c0_8] : memref<1x32xf32, #tpu.memory_space<vmem>>, vector<1x32xf32>
    %c0_9 = arith.constant 0 : index
    %c0_10 = arith.constant 0 : index
    %10 = vector.load %arg6[%c0_9, %c0_10] : memref<1x32xf32, #tpu.memory_space<vmem>>, vector<1x32xf32>
    %cst_11 = arith.constant dense<0.000000e+00> : vector<16xf32>
    %11 = vector.multi_reduction <add>, %8, %cst_11 [1] : vector<16x32xf32> to vector<16xf32>
    %12 = vector.shape_cast %11 : vector<16xf32> to vector<16x1xf32>
    %cst_12 = arith.constant 3.200000e+01 : f32
    %13 = vector.broadcast %cst_12 : f32 to vector<16x1xf32>
    %14 = arith.divf %12, %13 : vector<16x1xf32>
    %15 = vector.broadcast %14 : vector<16x1xf32> to vector<16x32xf32>
    %16 = arith.subf %8, %15 : vector<16x32xf32>
    %17 = arith.mulf %16, %16 : vector<16x32xf32>
    %cst_13 = arith.constant dense<0.000000e+00> : vector<16xf32>
    %18 = vector.multi_reduction <add>, %17, %cst_13 [1] : vector<16x32xf32> to vector<16xf32>
    %19 = vector.shape_cast %18 : vector<16xf32> to vector<16x1xf32>
    %cst_14 = arith.constant 3.200000e+01 : f32
    %20 = vector.broadcast %cst_14 : f32 to vector<16x1xf32>
    %21 = arith.divf %19, %20 : vector<16x1xf32>
    %cst_15 = arith.constant 9.99999974E-6 : f32
    %22 = vector.broadcast %cst_15 : f32 to vector<16x1xf32>
    %23 = arith.addf %21, %22 : vector<16x1xf32>
    %24 = math.rsqrt %23 : vector<16x1xf32>
    %25 = vector.broadcast %14 : vector<16x1xf32> to vector<16x32xf32>
    %26 = arith.subf %8, %25 : vector<16x32xf32>
    %27 = vector.broadcast %24 : vector<16x1xf32> to vector<16x32xf32>
    %28 = arith.mulf %26, %27 : vector<16x32xf32>
    %29 = vector.broadcast %9 : vector<1x32xf32> to vector<16x32xf32>
    %30 = arith.mulf %28, %29 : vector<16x32xf32>
    %31 = vector.broadcast %10 : vector<1x32xf32> to vector<16x32xf32>
    %32 = arith.addf %30, %31 : vector<16x32xf32>
    %33 = arith.truncf %32 : vector<16x32xf32> to vector<16x32xbf16>
    %c0_16 = arith.constant 0 : index
    %c0_17 = arith.constant 0 : index
    %34 = vector.load %arg7[%c0_16, %c0_17] : memref<32x64xbf16, #tpu.memory_space<vmem>>, vector<32x64xbf16>
    %cst_18 = arith.constant dense<0.000000e+00> : vector<16x64xf32>
    %35 = tpu.matmul %33, %34, %cst_18 {dimension_numbers = #tpu.dot_dimension_numbers<[1], [0], [0], [1], [0, 0, 1, 1], [], []>} : vector<16x32xbf16>, vector<32x64xbf16>, vector<16x64xf32> -> vector<16x64xf32>
    %c0_19 = arith.constant 0 : index
    %c0_20 = arith.constant 0 : index
    %36 = vector.load %arg8[%c0_19, %c0_20] : memref<1x64xf32, #tpu.memory_space<vmem>>, vector<1x64xf32>
    %37 = vector.broadcast %36 : vector<1x64xf32> to vector<16x64xf32>
    %38 = arith.addf %35, %37 : vector<16x64xf32>
    %cst_21 = arith.constant 0.000000e+00 : f32
    %39 = vector.broadcast %cst_21 : f32 to vector<16x64xf32>
    %40 = arith.maximumf %38, %39 : vector<16x64xf32>
    %41 = arith.truncf %40 : vector<16x64xf32> to vector<16x64xbf16>
    %c0_22 = arith.constant 0 : index
    %c0_23 = arith.constant 0 : index
    %42 = vector.load %arg9[%c0_22, %c0_23] : memref<64x32xbf16, #tpu.memory_space<vmem>>, vector<64x32xbf16>
    %cst_24 = arith.constant dense<0.000000e+00> : vector<16x32xf32>
    %43 = tpu.matmul %41, %42, %cst_24 {dimension_numbers = #tpu.dot_dimension_numbers<[1], [0], [0], [1], [0, 0, 1, 1], [], []>} : vector<16x64xbf16>, vector<64x32xbf16>, vector<16x32xf32> -> vector<16x32xf32>
    %c0_25 = arith.constant 0 : index
    %c0_26 = arith.constant 0 : index
    %44 = vector.load %arg10[%c0_25, %c0_26] : memref<1x32xf32, #tpu.memory_space<vmem>>, vector<1x32xf32>
    %45 = vector.broadcast %44 : vector<1x32xf32> to vector<16x32xf32>
    %46 = arith.addf %43, %45 : vector<16x32xf32>
    %47 = arith.addf %32, %46 : vector<16x32xf32>
    %c0_27 = arith.constant 0 : index
    %c0_28 = arith.constant 0 : index
    %48 = vector.load %arg11[%c0_27, %c0_28] : memref<1x32xf32, #tpu.memory_space<vmem>>, vector<1x32xf32>
    %c0_29 = arith.constant 0 : index
    %c0_30 = arith.constant 0 : index
    %49 = vector.load %arg12[%c0_29, %c0_30] : memref<1x32xf32, #tpu.memory_space<vmem>>, vector<1x32xf32>
    %cst_31 = arith.constant dense<0.000000e+00> : vector<16xf32>
    %50 = vector.multi_reduction <add>, %47, %cst_31 [1] : vector<16x32xf32> to vector<16xf32>
    %51 = vector.shape_cast %50 : vector<16xf32> to vector<16x1xf32>
    %cst_32 = arith.constant 3.200000e+01 : f32
    %52 = vector.broadcast %cst_32 : f32 to vector<16x1xf32>
    %53 = arith.divf %51, %52 : vector<16x1xf32>
    %54 = vector.broadcast %53 : vector<16x1xf32> to vector<16x32xf32>
    %55 = arith.subf %47, %54 : vector<16x32xf32>
    %56 = arith.mulf %55, %55 : vector<16x32xf32>
    %cst_33 = arith.constant dense<0.000000e+00> : vector<16xf32>
    %57 = vector.multi_reduction <add>, %56, %cst_33 [1] : vector<16x32xf32> to vector<16xf32>
    %58 = vector.shape_cast %57 : vector<16xf32> to vector<16x1xf32>
    %cst_34 = arith.constant 3.200000e+01 : f32
    %59 = vector.broadcast %cst_34 : f32 to vector<16x1xf32>
    %60 = arith.divf %58, %59 : vector<16x1xf32>
    %cst_35 = arith.constant 9.99999974E-6 : f32
    %61 = vector.broadcast %cst_35 : f32 to vector<16x1xf32>
    %62 = arith.addf %60, %61 : vector<16x1xf32>
    %63 = math.rsqrt %62 : vector<16x1xf32>
    %64 = vector.broadcast %53 : vector<16x1xf32> to vector<16x32xf32>
    %65 = arith.subf %47, %64 : vector<16x32xf32>
    %66 = vector.broadcast %63 : vector<16x1xf32> to vector<16x32xf32>
    %67 = arith.mulf %65, %66 : vector<16x32xf32>
    %68 = vector.broadcast %48 : vector<1x32xf32> to vector<16x32xf32>
    %69 = arith.mulf %67, %68 : vector<16x32xf32>
    %70 = vector.broadcast %49 : vector<1x32xf32> to vector<16x32xf32>
    %71 = arith.addf %69, %70 : vector<16x32xf32>
    %72 = arith.truncf %71 : vector<16x32xf32> to vector<16x32xbf16>
    %c0_36 = arith.constant 0 : index
    %c0_37 = arith.constant 0 : index
    %73 = vector.load %arg13[%c0_36, %c0_37] : memref<16x32xbf16, #tpu.memory_space<vmem>>, vector<16x32xbf16>
    tpu.vector_store %arg13[%c0_36, %c0_37], %72 {strides = array<i32>} : memref<16x32xbf16, #tpu.memory_space<vmem>>, vector<16x32xbf16>,
    return
  }
  func.func @transform_0(%arg0: i32) -> (i32, i32) {
    %c0_i32 = arith.constant 0 : i32
    %c0_i32_0 = arith.constant 0 : i32
    return %arg0, %c0_i32 : i32, i32
  }
  func.func @transform_1(%arg0: i32) -> (i32, i32) {
    %c0_i32 = arith.constant 0 : i32
    %c0_i32_0 = arith.constant 0 : i32
    return %arg0, %c0_i32 : i32, i32
  }
  func.func @transform_2(%arg0: i32) -> (i32, i32) {
    %c0_i32 = arith.constant 0 : i32
    %c0_i32_0 = arith.constant 0 : i32
    %c0_i32_1 = arith.constant 0 : i32
    return %c0_i32, %c0_i32_0 : i32, i32
  }
  func.func @transform_3(%arg0: i32) -> (i32, i32) {
    %c0_i32 = arith.constant 0 : i32
    %c0_i32_0 = arith.constant 0 : i32
    %c0_i32_1 = arith.constant 0 : i32
    return %c0_i32, %c0_i32_0 : i32, i32
  }
  func.func @transform_4(%arg0: i32) -> (i32, i32) {
    %c0_i32 = arith.constant 0 : i32
    %c0_i32_0 = arith.constant 0 : i32
    %c0_i32_1 = arith.constant 0 : i32
    return %c0_i32, %c0_i32_0 : i32, i32
  }
  func.func @transform_5(%arg0: i32) -> (i32, i32) {
    %c0_i32 = arith.constant 0 : i32
    %c0_i32_0 = arith.constant 0 : i32
    %c0_i32_1 = arith.constant 0 : i32
    return %c0_i32, %c0_i32_0 : i32, i32
  }
  func.func @transform_6(%arg0: i32) -> (i32, i32) {
    %c0_i32 = arith.constant 0 : i32
    %c0_i32_0 = arith.constant 0 : i32
    %c0_i32_1 = arith.constant 0 : i32
    return %c0_i32, %c0_i32_0 : i32, i32
  }
  func.func @transform_7(%arg0: i32) -> (i32, i32) {
    %c0_i32 = arith.constant 0 : i32
    %c0_i32_0 = arith.constant 0 : i32
    %c0_i32_1 = arith.constant 0 : i32
    return %c0_i32, %c0_i32_0 : i32, i32
  }
  func.func @transform_8(%arg0: i32) -> (i32, i32) {
    %c0_i32 = arith.constant 0 : i32
    %c0_i32_0 = arith.constant 0 : i32
    %c0_i32_1 = arith.constant 0 : i32
    return %c0_i32, %c0_i32_0 : i32, i32
  }
  func.func @transform_9(%arg0: i32) -> (i32, i32) {
    %c0_i32 = arith.constant 0 : i32
    %c0_i32_0 = arith.constant 0 : i32
    %c0_i32_1 = arith.constant 0 : i32
    return %c0_i32, %c0_i32_0 : i32, i32
  }
  func.func @transform_10(%arg0: i32) -> (i32, i32) {
    %c0_i32 = arith.constant 0 : i32
    %c0_i32_0 = arith.constant 0 : i32
    %c0_i32_1 = arith.constant 0 : i32
    return %c0_i32, %c0_i32_0 : i32, i32
  }
  func.func @transform_11(%arg0: i32) -> (i32, i32) {
    %c0_i32 = arith.constant 0 : i32
    %c0_i32_0 = arith.constant 0 : i32
    %c0_i32_1 = arith.constant 0 : i32
    return %c0_i32, %c0_i32_0 : i32, i32
  }
  func.func @transform_12(%arg0: i32) -> (i32, i32) {
    %c0_i32 = arith.constant 0 : i32
    %c0_i32_0 = arith.constant 0 : i32
    return %arg0, %c0_i32 : i32, i32
  }
}

module attributes {stable_mosaic.version = 11 : i64} {
  func.func @linear_kernel(%arg0: i32, %arg1: i32, %arg2: memref<16x32xbf16, #tpu.memory_space<vmem>>, %arg3: memref<32x128xbf16, #tpu.memory_space<vmem>>, %arg4: memref<1x128xf32, #tpu.memory_space<vmem>>, %arg5: memref<16x128xf32, #tpu.memory_space<vmem>>) attributes {dimension_semantics = [#tpu.dimension_semantics<parallel>, #tpu.dimension_semantics<parallel>], iteration_bounds = array<i64: 1, 1>, scalar_prefetch = 0 : i64, scratch_operands = 0 : i64, tpu.core_type = #tpu.core_type<tc>, window_params = [{transform_indices = @transform_0, window_bounds = array<i64: 16, 32>}, {transform_indices = @transform_1, window_bounds = array<i64: 32, 128>}, {transform_indices = @transform_2, window_bounds = array<i64: 1, 128>}, {transform_indices = @transform_3, window_bounds = array<i64: 16, 128>}]} {
    %c0 = arith.constant 0 : index
    %c0_0 = arith.constant 0 : index
    %0 = vector.load %arg2[%c0, %c0_0] : memref<16x32xbf16, #tpu.memory_space<vmem>>, vector<16x32xbf16>
    %c0_1 = arith.constant 0 : index
    %c0_2 = arith.constant 0 : index
    %1 = vector.load %arg3[%c0_1, %c0_2] : memref<32x128xbf16, #tpu.memory_space<vmem>>, vector<32x128xbf16>
    %cst = arith.constant dense<0.000000e+00> : vector<16x128xf32>
    %2 = tpu.matmul %0, %1, %cst {dimension_numbers = #tpu.dot_dimension_numbers<[1], [0], [0], [1], [0, 0, 1, 1], [], []>} : vector<16x32xbf16>, vector<32x128xbf16>, vector<16x128xf32> -> vector<16x128xf32>
    %c0_3 = arith.constant 0 : index
    %c0_4 = arith.constant 0 : index
    %3 = vector.load %arg4[%c0_3, %c0_4] : memref<1x128xf32, #tpu.memory_space<vmem>>, vector<1x128xf32>
    %4 = vector.broadcast %3 : vector<1x128xf32> to vector<16x128xf32>
    %5 = arith.addf %2, %4 : vector<16x128xf32>
    %c0_5 = arith.constant 0 : index
    %c0_6 = arith.constant 0 : index
    %6 = vector.load %arg5[%c0_5, %c0_6] : memref<16x128xf32, #tpu.memory_space<vmem>>, vector<16x128xf32>
    tpu.vector_store %arg5[%c0_5, %c0_6], %5 {strides = array<i32>} : memref<16x128xf32, #tpu.memory_space<vmem>>, vector<16x128xf32>,
    return
  }
  func.func @transform_0(%arg0: i32, %arg1: i32) -> (i32, i32) {
    %c0_i32 = arith.constant 0 : i32
    %c0_i32_0 = arith.constant 0 : i32
    return %arg1, %c0_i32 : i32, i32
  }
  func.func @transform_1(%arg0: i32, %arg1: i32) -> (i32, i32) {
    %c0_i32 = arith.constant 0 : i32
    %c0_i32_0 = arith.constant 0 : i32
    return %c0_i32, %arg0 : i32, i32
  }
  func.func @transform_2(%arg0: i32, %arg1: i32) -> (i32, i32) {
    %c0_i32 = arith.constant 0 : i32
    %c0_i32_0 = arith.constant 0 : i32
    return %c0_i32, %arg0 : i32, i32
  }
  func.func @transform_3(%arg0: i32, %arg1: i32) -> (i32, i32) {
    %c0_i32 = arith.constant 0 : i32
    return %arg1, %arg0 : i32, i32
  }
}

</mosaic_0001>

<llo_original>
// kernel: tpu_custom_call.1
$region0: #{tpu_custom_call.1}
  #allocation0 [shape = 'u32[]', space=smem, size = 0x4, offset = 0x4, fixed_abs, tag = 'smem constant byte address 0x4 - core index']
  #allocation1 [shape = 'u32[144,128]{1,0:T(1,128)}', space=vmem, size = 0x12000, scoped, tag = 'internal scratch']
  %s0 = inlined_call_operand.hbm [shape: f32[8,128], index: 0, kind: input, shape index: {}]
  %s1 = inlined_call_operand.hbm [shape: f32[8,128], index: 1, kind: output, shape index: {}]
  %s2 = sld [smem:[#allocation0]]
  $region41: #{tpu_custom_call.1} parent=0
    _
  %s4 = ssub.s32 1, %s2
  %s5 = scalar_select 0, %s4, %s2
  $region1: #{tpu_custom_call.1} parent=0
    #allocation2 [shape = 'u8[4096]{0}', space=vmem, size = 0x1000, scoped, tag = 'input window, operand 0, single buffered']
    #allocation3 [shape = 's32[2]{0}', space=sflag, size = 0x8, scoped, tag = 'scoped memory for tpu_custom_call.1']
    #allocation4 [shape = 's32[2]{0}', space=sflag, size = 0x8, scoped, tag = 'scoped memory for tpu_custom_call.1']
    #allocation5 [shape = 'u8[4096]{0}', space=vmem, size = 0x1000, scoped, tag = 'output window, operand 0, single buffered']
    %6 = vsyncpa [#allocation3], 0
    %7 = vsyncpa [#allocation4], 0
    loop: start=0, step=1, limit=4
    $region2: #{tpu_custom_call.1} parent=1 // loop_pre_header
      _
    $region3: #{tpu_custom_call.1} parent=1 // loop_header
      %s9 = sphi 0, %s13
      %p10 = scmp.ge.s32.totalorder %s9, 4
      %s17 = sphi 0, %s17
      %s19 = sphi 0, %s17
      %s20 = sphi 0, %s19
      %s34 = sphi 0, %s20
      %s38 = sphi 0, %s38
      %s40 = sphi 0, %s38
      %s41 = sphi 0, %s40
      %s55 = sphi 0, %s41
    $region4: #{tpu_custom_call.1} parent=1 // loop_header_branch
      %12 = sbr.rel (%p10) target = $region8
    $region5: #{tpu_custom_call.1} parent=1 // loop_body
      %s14 = ssub.s32 %s9, 1
      %s15 = ssub.s32 %s9, 2
      %s16 = sadd.s32 %s9, 1
      %s18 = sadd.s32 %s17, 1
      %p21 = scmp.eq.s32.totalorder %s9, 1
      %p22 = scmp.ne.s32.totalorder %s17, %s19
      %p23 = scmp.eq.s32.totalorder %s9, 0
      %p24 = por %p22, %p23
      %p25 = scmp.ne.s32.totalorder %s17, %s19
      %p26 = scmp.eq.s32.totalorder %s14, 1
      %p27 = por %p25, %p26
      %p28 = scmp.ne.s32.totalorder %s19, %s20
      %p29 = scmp.eq.s32.totalorder %s14, 0
      %p30 = por %p28, %p29
      %p31 = scmp.ne.s32.totalorder %s19, %s20
      %p32 = scmp.eq.s32.totalorder %s15, 1
      %p33 = por %p31, %p32
      %p35 = scmp.ne.s32.totalorder %s20, %s34
      %p36 = scmp.eq.s32.totalorder %s15, 0
      %p37 = por %p35, %p36
      %s39 = sadd.s32 %s38, 1
      %p42 = scmp.eq.s32.totalorder %s9, 1
      %p43 = scmp.ne.s32.totalorder %s38, %s40
      %p44 = scmp.eq.s32.totalorder %s9, 0
      %p45 = por %p43, %p44
      %p46 = scmp.ne.s32.totalorder %s38, %s40
      %p47 = scmp.eq.s32.totalorder %s14, 1
      %p48 = por %p46, %p47
      %p49 = scmp.ne.s32.totalorder %s40, %s41
      %p50 = scmp.eq.s32.totalorder %s14, 0
      %p51 = por %p49, %p50
      %p52 = scmp.ne.s32.totalorder %s40, %s41
      %p53 = scmp.eq.s32.totalorder %s15, 1
      %p54 = por %p52, %p53
      %p56 = scmp.ne.s32.totalorder %s41, %s55
      %p57 = scmp.eq.s32.totalorder %s15, 0
      %p58 = por %p56, %p57
      %p59 = scmp.le.s32.totalorder 1, %s9
      %p60 = scmp.lt.s32.totalorder %s9, 3
      %p61 = pnand %p59, %p60
      %p62 = pneg %p61
      // Predicated region
      $region9: #{tpu_custom_call.1} parent=5 // pred_check
        _
      $region10: #{tpu_custom_call.1} parent=5 // pred_check_branch
        %64 = sbr.rel (%p61) target = $region12
      $region11: #{tpu_custom_call.1} parent=5 // pred_region
        %s65 = ssub.s32 %s9, 1
        // Predicated region
        $region13: #{tpu_custom_call.1} parent=11 // pred_check
          %p66 = pneg %p30
        $region14: #{tpu_custom_call.1} parent=11 // pred_check_branch
          %68 = sbr.rel (%p66) target = $region16
        $region15: #{tpu_custom_call.1} parent=11 // pred_region
          %s70 = ssub.s32 128, 128
          %71 = vsyncadd [#allocation3], %s70
          %s73 = sshll.u32 [#allocation2], 4
          %s74 = int_to_ptr.vmem [resolvable:$true] %s73
          %76 = dma.hbm_to_vmem [thread:$0]  %s0, 128, %s74, [#allocation3]
        $region16: #{tpu_custom_call.1} parent=11 // pred_fallthru
          _
      $region12: #{tpu_custom_call.1} parent=5 // pred_fallthru
        _
      %p77 = scmp.lt.s32.totalorder %s9, 2
      // Predicated region
      $region17: #{tpu_custom_call.1} parent=5 // pred_check
        %p78 = pneg %p77
      $region18: #{tpu_custom_call.1} parent=5 // pred_check_branch
        %80 = sbr.rel (%p78) target = $region20
      $region19: #{tpu_custom_call.1} parent=5 // pred_region
        _
      $region20: #{tpu_custom_call.1} parent=5 // pred_fallthru
        _
      %p81 = scmp.le.s32.totalorder 1, %s9
      %p82 = scmp.lt.s32.totalorder %s9, 3
      %p83 = pnand %p81, %p82
      %p84 = pneg %p83
      // Predicated region
      $region21: #{tpu_custom_call.1} parent=5 // pred_check
        _
      $region22: #{tpu_custom_call.1} parent=5 // pred_check_branch
        %86 = sbr.rel (%p83) target = $region24
      $region23: #{tpu_custom_call.1} parent=5 // pred_region
        %s87 = ssub.s32 %s9, 1
        // Predicated region
        $region25: #{tpu_custom_call.1} parent=23 // pred_check
          %p88 = pneg %p30
        $region26: #{tpu_custom_call.1} parent=23 // pred_check_branch
          %90 = sbr.rel (%p88) target = $region28
        $region27: #{tpu_custom_call.1} parent=23 // pred_region
          %91 = dma.done [#allocation3], 128
        $region28: #{tpu_custom_call.1} parent=23 // pred_fallthru
          _
        %p92 = pneg %p30
        %p93 = pneg %p27
        %p94 = pneg %p51
        %p95 = pneg %p48
        %v96 = vld [vmem:[#allocation2] sm:$0xff]
        %97 = vst [vmem:[#allocation5] sm:$0xff] %v96
        // Predicated region
        $region29: #{tpu_custom_call.1} parent=23 // pred_check
          %p98 = pneg %p48
        $region30: #{tpu_custom_call.1} parent=23 // pred_check_branch
          %100 = sbr.rel (%p98) target = $region32
        $region31: #{tpu_custom_call.1} parent=23 // pred_region
          %s102 = ssub.s32 128, 128
          %103 = vsyncadd [#allocation4], %s102
          %s105 = sshll.u32 [#allocation5], 4
          %s106 = int_to_ptr.vmem [resolvable:$true] %s105
          %108 = dma.vmem_to_hbm [thread:$0]  %s106, 128, %s1, [#allocation4]
        $region32: #{tpu_custom_call.1} parent=23 // pred_fallthru
          _
        // Predicated region
        $region33: #{tpu_custom_call.1} parent=23 // pred_check
          %p109 = pneg %p48
        $region34: #{tpu_custom_call.1} parent=23 // pred_check_branch
          %111 = sbr.rel (%p109) target = $region36
        $region35: #{tpu_custom_call.1} parent=23 // pred_region
          %112 = dma.done [#allocation4], 128
        $region36: #{tpu_custom_call.1} parent=23 // pred_fallthru
          _
      $region24: #{tpu_custom_call.1} parent=5 // pred_fallthru
        _
      %p113 = scmp.le.s32.totalorder 2, %s9
      // Predicated region
      $region37: #{tpu_custom_call.1} parent=5 // pred_check
        %p114 = pneg %p113
      $region38: #{tpu_custom_call.1} parent=5 // pred_check_branch
        %116 = sbr.rel (%p114) target = $region40
      $region39: #{tpu_custom_call.1} parent=5 // pred_region
        %s117 = ssub.s32 %s9, 2
      $region40: #{tpu_custom_call.1} parent=5 // pred_fallthru
        _
    $region6: #{tpu_custom_call.1} parent=1 // loop_footer
      %s13 = sadd.s32 1, %s9
    $region7: #{tpu_custom_call.1} parent=1 // loop_footer_branch
      %8 = sbr.rel target = $region3
    $region8: #{tpu_custom_call.1} parent=1 // loop_exit
      _
    %118 = vsyncpa [#allocation3], 1
    %s119 = scalar_lea.sflag [#allocation3], 1
    %120 = vsyncpa %s119, 1
    %121 = vsyncpa [#allocation4], 1
    %s122 = scalar_lea.sflag [#allocation4], 1
    %123 = vsyncpa %s122, 1

// kernel: mlm_transformer_forward.7
$region0: #{mlm_transformer_forward.7}
  #allocation0 [shape = 'u32[]', space=smem, size = 0x4, offset = 0x4, fixed_abs, tag = 'smem constant byte address 0x4 - core index']
  #allocation1 [shape = 'u32[144,128]{1,0:T(1,128)}', space=vmem, size = 0x12000, scoped, tag = 'internal scratch']
  %s0 = inlined_call_operand.vmem [shape: bf16[16,32], index: 0, kind: input, shape index: {}]
  %s1 = inlined_call_operand.vmem [shape: bf16[32,96], index: 1, kind: input, shape index: {}]
  %s2 = inlined_call_operand.vmem [shape: f32[1,96], index: 2, kind: input, shape index: {}]
  %s3 = inlined_call_operand.vmem [shape: bf16[16,96], index: 3, kind: output, shape index: {}]
  %s4 = sld [smem:[#allocation0]]
  $region22: #{mlm_transformer_forward.7} parent=0
    _
  %s6 = ssub.s32 1, %s4
  %s7 = scalar_select 0, %s6, %s4
  // Predicated region
  $region2: #{mlm_transformer_forward.7} parent=0 // pred_check
    _
  $region3: #{mlm_transformer_forward.7} parent=0 // pred_check_branch
    %9 = sbr.rel (0) target = $region5
  $region4: #{mlm_transformer_forward.7} parent=0 // pred_region
    _
  $region5: #{mlm_transformer_forward.7} parent=0 // pred_fallthru
    _
  // Predicated region
  $region6: #{mlm_transformer_forward.7} parent=0 // pred_check
    _
  $region7: #{mlm_transformer_forward.7} parent=0 // pred_check_branch
    %11 = sbr.rel (0) target = $region9
  $region8: #{mlm_transformer_forward.7} parent=0 // pred_region
    _
  $region9: #{mlm_transformer_forward.7} parent=0 // pred_fallthru
    _
  // Predicated region
  $region10: #{mlm_transformer_forward.7} parent=0 // pred_check
    _
  $region11: #{mlm_transformer_forward.7} parent=0 // pred_check_branch
    %13 = sbr.rel (0) target = $region13
  $region12: #{mlm_transformer_forward.7} parent=0 // pred_region
    _
  $region13: #{mlm_transformer_forward.7} parent=0 // pred_fallthru
    _
  %v15 = vld [vmem:[%s0] sm:$0xf]
  %v16 = vld [vmem:[%s0 + $0x4] sm:$0xf]
  %v17 = vld [vmem:[%s1] sm:$0xf]
  %v18 = vld [vmem:[%s1 + $0x4] sm:$0xf]
  %v19 = vld [vmem:[%s1 + $0x8] sm:$0xf]
  %v20 = vld [vmem:[%s1 + $0xc] sm:$0xf]
  %v21 = vld [vmem:[%s2] sm:$0x1]
  %v23 = vlaneseq
  %v24 = vshrl.u32 %v23, 7
  %v25 = vsub.s32 0, %v24
  %v26 = vrot.slane %v21, %v25
  %v30 = vunpack.c.l.b16 %v15
  %v31 = vunpack.c.l.b16 %v16
  %v32 = vpack.c.b16 %v31, %v30
  %v37 = vunpack.c.l.b16 %v17
  %v38 = vunpack.c.l.b16 %v18
  %v39 = vunpack.c.l.b16 %v19
  %v40 = vunpack.c.l.b16 %v20
  %v41 = vpack.c.b16 %v38, %v37
  %v42 = vpack.c.b16 %v40, %v39
  %vm45 = vcmask 261120
  %v47 = vsel %vm45, %v32, 0
  %49 = vmatprep.subr.bf16.mxu0 0
  %50 = vmatpush1.bf16.msra.mxu0 0
  %51 = vmatprep.subr.bf16.mxu0 0
  %52 = vmatpush1.bf16.msra.mxu0 0
  %53 = vmatprep.subr.bf16.mxu0 0
  %54 = vmatpush1.bf16.msra.mxu0 0
  %55 = vmatprep.subr.bf16.mxu0 0
  %56 = vmatpush1.bf16.msra.mxu0 0
  %57 = vmatprep.subr.bf16.mxu0 0
  %58 = vmatpush1.bf16.msra.mxu0 0
  %59 = vmatprep.subr.bf16.mxu0 0
  %60 = vmatpush1.bf16.msra.mxu0 0
  %61 = vmatprep.subr.bf16.mxu0 0
  %62 = vmatpush1.bf16.msra.mxu0 %v42
  %63 = vmatprep.subr.bf16.mxu0 0
  %64 = vmatpush1.bf16.msra.mxu0 %v41
  %65 = vmatprep.subr.bf16.mxu0 0
  %66 = vmatpush2.bf16.msra.mxu0 0
  %67 = vmatprep.subr.bf16.mxu0 0
  %68 = vmatpush2.bf16.msra.mxu0 0
  %69 = vmatprep.subr.bf16.mxu0 0
  %70 = vmatpush2.bf16.msra.mxu0 0
  %71 = vmatprep.subr.bf16.mxu0 0
  %72 = vmatpush2.bf16.msra.mxu0 0
  %73 = vmatprep.subr.bf16.mxu0 0
  %74 = vmatpush2.bf16.msra.mxu0 0
  %75 = vmatprep.subr.bf16.mxu0 0
  %76 = vmatpush2.bf16.msra.mxu0 0
  %77 = vmatprep.subr.bf16.mxu0 0
  %78 = vmatpush2.bf16.msra.mxu0 0
  %79 = vmatprep.subr.bf16.mxu0 0
  %80 = vmatpush2.bf16.msra.mxu0 0
  %81 = vmatprep.mubr.bf16.mxu0 0
  %82 = vmatmul.mubr.bf16.gmra.mxu0 %v47
  %v83 = vpop.f32.mrf.mxu0
  %v84 = vadd.f32 %v26, %v83
  %v85 = vpop.f32.mrf.mxu0
  %v86 = vpop.f32.mrf.mxu0
  %v87 = vadd.f32 %v26, %v86
  %v88 = vpop.f32.mrf.mxu0
  %89 = vdwg.mxu0
  %v90 = vpack.c.bf16 %v87, %v84
  %v92 = vunpack.c.l.b16 %v90
  %v93 = vunpack.c.h.b16 %v90
  %v94 = vpack.c.b16 %v92, %v92
  %v95 = vpack.c.b16 %v93, %v93
  %vm98 = vcmask 781312
  %99 = vst.msk [vmem:[%s3] sm:$0xf] %vm98, %v94
  %100 = vst.msk [vmem:[%s3 + $0x4] sm:$0xf] %vm98, %v95
  // Predicated region
  $region14: #{mlm_transformer_forward.7} parent=0 // pred_check
    _
  $region15: #{mlm_transformer_forward.7} parent=0 // pred_check_branch
    %102 = sbr.rel (0) target = $region17
  $region16: #{mlm_transformer_forward.7} parent=0 // pred_region
    _
  $region17: #{mlm_transformer_forward.7} parent=0 // pred_fallthru
    _
  // Predicated region
  $region18: #{mlm_transformer_forward.7} parent=0 // pred_check
    _
  $region19: #{mlm_transformer_forward.7} parent=0 // pred_check_branch
    %104 = sbr.rel (0) target = $region21
  $region20: #{mlm_transformer_forward.7} parent=0 // pred_region
    _
  $region21: #{mlm_transformer_forward.7} parent=0 // pred_fallthru
    _

// kernel: mlm_transformer_forward.13
$region0: #{mlm_transformer_forward.13}
  #allocation0 [shape = 'u32[]', space=smem, size = 0x4, offset = 0x4, fixed_abs, tag = 'smem constant byte address 0x4 - core index']
  #allocation1 [shape = 'u32[144,128]{1,0:T(1,128)}', space=vmem, size = 0x12000, scoped, tag = 'internal scratch']
  %s0 = inlined_call_operand.vmem [shape: bf16[16,32], index: 0, kind: input, shape index: {}]
  %s1 = inlined_call_operand.vmem [shape: bf16[32,128], index: 1, kind: input, shape index: {}]
  %s2 = inlined_call_operand.vmem [shape: f32[1,128], index: 2, kind: input, shape index: {}]
  %s3 = inlined_call_operand.hbm [shape: f32[16,128], index: 3, kind: output, shape index: {}]
  %s4 = sld [smem:[#allocation0]]
  $region22: #{mlm_transformer_forward.13} parent=0
    _
  %s6 = ssub.s32 1, %s4
  %s7 = scalar_select 0, %s6, %s4
  $region1: #{mlm_transformer_forward.13} parent=0
    #allocation2 [shape = 'u8[8192]{0}', space=vmem, size = 0x2000, scoped, tag = 'output window, operand 0, single buffered']
    #allocation3 [shape = 's32[1]{0}', space=sflag, size = 0x4, scoped, tag = 'scoped memory for mlm_transformer_forward.13']
    %8 = vsyncpa [#allocation3], 0
    // Predicated region
    $region2: #{mlm_transformer_forward.13} parent=1 // pred_check
      _
    $region3: #{mlm_transformer_forward.13} parent=1 // pred_check_branch
      %10 = sbr.rel (0) target = $region5
    $region4: #{mlm_transformer_forward.13} parent=1 // pred_region
      _
    $region5: #{mlm_transformer_forward.13} parent=1 // pred_fallthru
      _
    // Predicated region
    $region6: #{mlm_transformer_forward.13} parent=1 // pred_check
      _
    $region7: #{mlm_transformer_forward.13} parent=1 // pred_check_branch
      %12 = sbr.rel (0) target = $region9
    $region8: #{mlm_transformer_forward.13} parent=1 // pred_region
      _
    $region9: #{mlm_transformer_forward.13} parent=1 // pred_fallthru
      _
    // Predicated region
    $region10: #{mlm_transformer_forward.13} parent=1 // pred_check
      _
    $region11: #{mlm_transformer_forward.13} parent=1 // pred_check_branch
      %14 = sbr.rel (0) target = $region13
    $region12: #{mlm_transformer_forward.13} parent=1 // pred_region
      _
    $region13: #{mlm_transformer_forward.13} parent=1 // pred_fallthru
      _
    %v16 = vld [vmem:[%s0] sm:$0xf]
    %v17 = vld [vmem:[%s0 + $0x4] sm:$0xf]
    %v18 = vld [vmem:[%s1] sm:$0xf]
    %v19 = vld [vmem:[%s1 + $0x4] sm:$0xf]
    %v20 = vld [vmem:[%s1 + $0x8] sm:$0xf]
    %v21 = vld [vmem:[%s1 + $0xc] sm:$0xf]
    %v22 = vld [vmem:[%s2] sm:$0x1]
    %v24 = vlaneseq
    %v25 = vshrl.u32 %v24, 7
    %v26 = vsub.s32 0, %v25
    %v27 = vrot.slane %v22, %v26
    %v31 = vunpack.c.l.b16 %v16
    %v32 = vunpack.c.l.b16 %v17
    %v33 = vpack.c.b16 %v32, %v31
    %v38 = vunpack.c.l.b16 %v18
    %v39 = vunpack.c.l.b16 %v19
    %v40 = vunpack.c.l.b16 %v20
    %v41 = vunpack.c.l.b16 %v21
    %v42 = vpack.c.b16 %v39, %v38
    %v43 = vpack.c.b16 %v41, %v40
    %vm46 = vcmask 261120
    %v48 = vsel %vm46, %v33, 0
    %50 = vmatprep.subr.bf16.mxu0 0
    %51 = vmatpush1.bf16.msra.mxu0 0
    %52 = vmatprep.subr.bf16.mxu0 0
    %53 = vmatpush1.bf16.msra.mxu0 0
    %54 = vmatprep.subr.bf16.mxu0 0
    %55 = vmatpush1.bf16.msra.mxu0 0
    %56 = vmatprep.subr.bf16.mxu0 0
    %57 = vmatpush1.bf16.msra.mxu0 0
    %58 = vmatprep.subr.bf16.mxu0 0
    %59 = vmatpush1.bf16.msra.mxu0 0
    %60 = vmatprep.subr.bf16.mxu0 0
    %61 = vmatpush1.bf16.msra.mxu0 0
    %62 = vmatprep.subr.bf16.mxu0 0
    %63 = vmatpush1.bf16.msra.mxu0 %v43
    %64 = vmatprep.subr.bf16.mxu0 0
    %65 = vmatpush1.bf16.msra.mxu0 %v42
    %66 = vmatprep.subr.bf16.mxu0 0
    %67 = vmatpush2.bf16.msra.mxu0 0
    %68 = vmatprep.subr.bf16.mxu0 0
    %69 = vmatpush2.bf16.msra.mxu0 0
    %70 = vmatprep.subr.bf16.mxu0 0
    %71 = vmatpush2.bf16.msra.mxu0 0
    %72 = vmatprep.subr.bf16.mxu0 0
    %73 = vmatpush2.bf16.msra.mxu0 0
    %74 = vmatprep.subr.bf16.mxu0 0
    %75 = vmatpush2.bf16.msra.mxu0 0
    %76 = vmatprep.subr.bf16.mxu0 0
    %77 = vmatpush2.bf16.msra.mxu0 0
    %78 = vmatprep.subr.bf16.mxu0 0
    %79 = vmatpush2.bf16.msra.mxu0 0
    %80 = vmatprep.subr.bf16.mxu0 0
    %81 = vmatpush2.bf16.msra.mxu0 0
    %82 = vmatprep.mubr.bf16.mxu0 0
    %83 = vmatmul.mubr.bf16.gmra.mxu0 %v48
    %v84 = vpop.f32.mrf.mxu0
    %v85 = vadd.f32 %v27, %v84
    %v86 = vpop.f32.mrf.mxu0
    %v87 = vpop.f32.mrf.mxu0
    %v88 = vadd.f32 %v27, %v87
    %v89 = vpop.f32.mrf.mxu0
    %90 = vdwg.mxu0
    %91 = vst [vmem:[#allocation2] sm:$0xff] %v85
    %92 = vst [vmem:[#allocation2 + $0x8] sm:$0xff] %v88
    // Predicated region
    $region14: #{mlm_transformer_forward.13} parent=1 // pred_check
      _
    $region15: #{mlm_transformer_forward.13} parent=1 // pred_check_branch
      %94 = sbr.rel (0) target = $region17
    $region16: #{mlm_transformer_forward.13} parent=1 // pred_region
      %s96 = ssub.s32 256, 256
      %97 = vsyncadd [#allocation3], %s96
      %s98 = sshll.u32 [#allocation2], 4
      %s99 = int_to_ptr.vmem [resolvable:$true] %s98
      %104 = dma.vmem_to_hbm [thread:$0]  %s99, 256, %s3, [#allocation3], 128, 128, 8
    $region17: #{mlm_transformer_forward.13} parent=1 // pred_fallthru
      _
    // Predicated region
    $region18: #{mlm_transformer_forward.13} parent=1 // pred_check
      _
    $region19: #{mlm_transformer_forward.13} parent=1 // pred_check_branch
      %106 = sbr.rel (0) target = $region21
    $region20: #{mlm_transformer_forward.13} parent=1 // pred_region
      %107 = dma.done [#allocation3], 256
    $region21: #{mlm_transformer_forward.13} parent=1 // pred_fallthru
      _
    %108 = vsyncpa [#allocation3], 1

// kernel: mlm_transformer_forward.8
$region0: #{mlm_transformer_forward.8}
  #allocation0 [shape = 'u32[]', space=smem, size = 0x4, offset = 0x4, fixed_abs, tag = 'smem constant byte address 0x4 - core index']
  #allocation1 [shape = 'u32[144,128]{1,0:T(1,128)}', space=vmem, size = 0x12000, scoped, tag = 'internal scratch']
  #allocation2 [shape = 'f32[4,8,1]{2,1,0:T(8,128)}', space=vmem, size = 0x4000, scoped, tag = 'scratch operand']
  #allocation3 [shape = 'f32[4,8,1]{2,1,0:T(8,128)}', space=vmem, size = 0x4000, scoped, tag = 'scratch operand']
  #allocation4 [shape = 'f32[4,8,8]{2,1,0:T(8,128)}', space=vmem, size = 0x4000, scoped, tag = 'scratch operand']
  %s0 = inlined_call_operand.vmem [shape: bf16[2,4,8,8], index: 0, kind: input, shape index: {}]
  %s1 = inlined_call_operand.vmem [shape: bf16[2,4,8,8], index: 1, kind: input, shape index: {}]
  %s2 = inlined_call_operand.vmem [shape: bf16[2,4,8,8], index: 2, kind: input, shape index: {}]
  %s3 = inlined_call_operand.vmem [shape: bf16[2,8,32], index: 3, kind: output, shape index: {}]
  %s4 = sld [smem:[#allocation0]]
  $region53: #{mlm_transformer_forward.8} parent=0
    _
  %s6 = ssub.s32 1, %s4
  %s7 = scalar_select 0, %s6, %s4
  loop: start=0, step=1, limit=4
  $region2: #{mlm_transformer_forward.8} parent=0 // loop_pre_header
    _
  $region3: #{mlm_transformer_forward.8} parent=0 // loop_header
    %s9 = sphi 0, %s13
    %p10 = scmp.ge.s32.totalorder %s9, 4
    %s16 = sphi 0, %s35
    %s17 = sphi 0, %s31
    %s18 = sphi 0, %s27
    %s19 = sphi 0, %s16
    %s20 = sphi 0, %s17
    %s21 = sphi 0, %s18
    %s22 = sphi 0, %s19
    %s23 = sphi 0, %s20
    %s24 = sphi 0, %s21
    %s40 = sphi 0, %s42
    %s43 = sphi 0, %s40
    %s44 = sphi 0, %s43
    %s60 = sphi 0, %s44
    %s70 = sphi 0, %s72
    %s73 = sphi 0, %s70
    %s74 = sphi 0, %s73
    %s90 = sphi 0, %s74
    %s100 = sphi 0, %s102
    %s103 = sphi 0, %s100
    %s104 = sphi 0, %s103
    %s120 = sphi 0, %s104
    %s128 = sphi 0, %s130
    %s131 = sphi 0, %s128
    %s132 = sphi 0, %s131
    %s148 = sphi 0, %s132
  $region4: #{mlm_transformer_forward.8} parent=0 // loop_header_branch
    %12 = sbr.rel (%p10) target = $region8
  $region5: #{mlm_transformer_forward.8} parent=0 // loop_body
    %s14 = ssub.s32 %s9, 1
    %s15 = ssub.s32 %s9, 2
    %s25 = sadd.s32 1, %s18
    %p26 = scmp.ge.s32.totalorder %s25, 1
    %s27 = scalar_select %p26, 0, %s25
    %s28 = sadd.s32 1, %s17
    %s29 = scalar_select %p26, %s28, %s17
    %p30 = scmp.ge.s32.totalorder %s29, 1
    %s31 = scalar_select %p30, 0, %s29
    %s32 = sadd.s32 1, %s16
    %s33 = scalar_select %p30, %s32, %s16
    %p34 = scmp.ge.s32.totalorder %s33, 2
    %s35 = scalar_select %p34, 0, %s33
    %s36 = ssub.s32 %s16, %s35
    %s37 = ssub.s32 %s17, %s31
    %s38 = sor.u32 %s36, %s37
    %p39 = scmp.eq.s32.totalorder %s38, 0
    %s41 = sadd.s32 %s40, 1
    %s42 = scalar_select %p39, %s40, %s41
    %p45 = pneg %p39
    %p46 = scmp.eq.s32.totalorder %s9, 1
    %p47 = por %p45, %p46
    %p48 = scmp.ne.s32.totalorder %s40, %s43
    %p49 = scmp.eq.s32.totalorder %s9, 0
    %p50 = por %p48, %p49
    %p51 = scmp.ne.s32.totalorder %s40, %s43
    %p52 = scmp.eq.s32.totalorder %s14, 1
    %p53 = por %p51, %p52
    %p54 = scmp.ne.s32.totalorder %s43, %s44
    %p55 = scmp.eq.s32.totalorder %s14, 0
    %p56 = por %p54, %p55
    %p57 = scmp.ne.s32.totalorder %s43, %s44
    %p58 = scmp.eq.s32.totalorder %s15, 1
    %p59 = por %p57, %p58
    %p61 = scmp.ne.s32.totalorder %s44, %s60
    %p62 = scmp.eq.s32.totalorder %s15, 0
    %p63 = por %p61, %p62
    %s64 = ssub.s32 %s16, %s35
    %s65 = ssub.s32 %s17, %s31
    %s66 = sor.u32 %s64, %s65
    %s67 = ssub.s32 %s18, %s27
    %s68 = sor.u32 %s66, %s67
    %p69 = scmp.eq.s32.totalorder %s68, 0
    %s71 = sadd.s32 %s70, 1
    %s72 = scalar_select %p69, %s70, %s71
    %p75 = pneg %p69
    %p76 = scmp.eq.s32.totalorder %s9, 1
    %p77 = por %p75, %p76
    %p78 = scmp.ne.s32.totalorder %s70, %s73
    %p79 = scmp.eq.s32.totalorder %s9, 0
    %p80 = por %p78, %p79
    %p81 = scmp.ne.s32.totalorder %s70, %s73
    %p82 = scmp.eq.s32.totalorder %s14, 1
    %p83 = por %p81, %p82
    %p84 = scmp.ne.s32.totalorder %s73, %s74
    %p85 = scmp.eq.s32.totalorder %s14, 0
    %p86 = por %p84, %p85
    %p87 = scmp.ne.s32.totalorder %s73, %s74
    %p88 = scmp.eq.s32.totalorder %s15, 1
    %p89 = por %p87, %p88
    %p91 = scmp.ne.s32.totalorder %s74, %s90
    %p92 = scmp.eq.s32.totalorder %s15, 0
    %p93 = por %p91, %p92
    %s94 = ssub.s32 %s16, %s35
    %s95 = ssub.s32 %s17, %s31
    %s96 = sor.u32 %s94, %s95
    %s97 = ssub.s32 %s18, %s27
    %s98 = sor.u32 %s96, %s97
    %p99 = scmp.eq.s32.totalorder %s98, 0
    %s101 = sadd.s32 %s100, 1
    %s102 = scalar_select %p99, %s100, %s101
    %p105 = pneg %p99
    %p106 = scmp.eq.s32.totalorder %s9, 1
    %p107 = por %p105, %p106
    %p108 = scmp.ne.s32.totalorder %s100, %s103
    %p109 = scmp.eq.s32.totalorder %s9, 0
    %p110 = por %p108, %p109
    %p111 = scmp.ne.s32.totalorder %s100, %s103
    %p112 = scmp.eq.s32.totalorder %s14, 1
    %p113 = por %p111, %p112
    %p114 = scmp.ne.s32.totalorder %s103, %s104
    %p115 = scmp.eq.s32.totalorder %s14, 0
    %p116 = por %p114, %p115
    %p117 = scmp.ne.s32.totalorder %s103, %s104
    %p118 = scmp.eq.s32.totalorder %s15, 1
    %p119 = por %p117, %p118
    %p121 = scmp.ne.s32.totalorder %s104, %s120
    %p122 = scmp.eq.s32.totalorder %s15, 0
    %p123 = por %p121, %p122
    %s124 = ssub.s32 %s16, %s35
    %s125 = ssub.s32 %s17, %s31
    %s126 = sor.u32 %s124, %s125
    %p127 = scmp.eq.s32.totalorder %s126, 0
    %s129 = sadd.s32 %s128, 1
    %s130 = scalar_select %p127, %s128, %s129
    %p133 = pneg %p127
    %p134 = scmp.eq.s32.totalorder %s9, 1
    %p135 = por %p133, %p134
    %p136 = scmp.ne.s32.totalorder %s128, %s131
    %p137 = scmp.eq.s32.totalorder %s9, 0
    %p138 = por %p136, %p137
    %p139 = scmp.ne.s32.totalorder %s128, %s131
    %p140 = scmp.eq.s32.totalorder %s14, 1
    %p141 = por %p139, %p140
    %p142 = scmp.ne.s32.totalorder %s131, %s132
    %p143 = scmp.eq.s32.totalorder %s14, 0
    %p144 = por %p142, %p143
    %p145 = scmp.ne.s32.totalorder %s131, %s132
    %p146 = scmp.eq.s32.totalorder %s15, 1
    %p147 = por %p145, %p146
    %p149 = scmp.ne.s32.totalorder %s132, %s148
    %p150 = scmp.eq.s32.totalorder %s15, 0
    %p151 = por %p149, %p150
    %p152 = scmp.le.s32.totalorder 1, %s9
    %p153 = scmp.lt.s32.totalorder %s9, 3
    %p154 = pnand %p152, %p153
    %p155 = pneg %p154
    // Predicated region
    $region9: #{mlm_transformer_forward.8} parent=5 // pred_check
      _
    $region10: #{mlm_transformer_forward.8} parent=5 // pred_check_branch
      %157 = sbr.rel (%p154) target = $region12
    $region11: #{mlm_transformer_forward.8} parent=5 // pred_region
      %s158 = ssub.s32 %s9, 1
    $region12: #{mlm_transformer_forward.8} parent=5 // pred_fallthru
      _
    %p159 = scmp.lt.s32.totalorder %s9, 2
    // Predicated region
    $region13: #{mlm_transformer_forward.8} parent=5 // pred_check
      %p160 = pneg %p159
    $region14: #{mlm_transformer_forward.8} parent=5 // pred_check_branch
      %162 = sbr.rel (%p160) target = $region16
    $region15: #{mlm_transformer_forward.8} parent=5 // pred_region
      // Predicated region
      $region17: #{mlm_transformer_forward.8} parent=15 // pred_check
        %p163 = pneg %p50
      $region18: #{mlm_transformer_forward.8} parent=15 // pred_check_branch
        %165 = sbr.rel (%p163) target = $region20
      $region19: #{mlm_transformer_forward.8} parent=15 // pred_region
        %s166 = smul.u32 4, %s17
        %p167 = scmp.lt.s32.totalorder %s16, 1
        %s168 = scalar_select %p167, %s16, 1
        %p169 = scmp.lt.s32.totalorder %s166, 3
        %s170 = scalar_select %p169, %s166, 3
        %s171 = smul.addr %s168, 4
        %s172 = sadd.s32 %s170, %s171
        %s173 = smul.addr %s172, 4
        %s174 = scalar_lea.vmem %s0, %s173
        %s175 = smul.u32 4, %s17
      $region20: #{mlm_transformer_forward.8} parent=15 // pred_fallthru
        _
      // Predicated region
      $region21: #{mlm_transformer_forward.8} parent=15 // pred_check
        %p176 = pneg %p80
      $region22: #{mlm_transformer_forward.8} parent=15 // pred_check_branch
        %178 = sbr.rel (%p176) target = $region24
      $region23: #{mlm_transformer_forward.8} parent=15 // pred_region
        %s179 = smul.u32 4, %s17
        %p180 = scmp.lt.s32.totalorder %s16, 1
        %s181 = scalar_select %p180, %s16, 1
        %p182 = scmp.lt.s32.totalorder %s179, 3
        %s183 = scalar_select %p182, %s179, 3
        %p184 = scmp.lt.s32.totalorder %s18, 0
        %s185 = scalar_select %p184, %s18, 0
        %s186 = sadd.s32 %s185, %s183
        %s187 = smul.addr %s181, 4
        %s188 = sadd.s32 %s186, %s187
        %s189 = smul.addr %s188, 4
        %s190 = scalar_lea.vmem %s1, %s189
        %s191 = smul.u32 4, %s17
      $region24: #{mlm_transformer_forward.8} parent=15 // pred_fallthru
        _
      // Predicated region
      $region25: #{mlm_transformer_forward.8} parent=15 // pred_check
        %p192 = pneg %p110
      $region26: #{mlm_transformer_forward.8} parent=15 // pred_check_branch
        %194 = sbr.rel (%p192) target = $region28
      $region27: #{mlm_transformer_forward.8} parent=15 // pred_region
        %s195 = smul.u32 4, %s17
        %p196 = scmp.lt.s32.totalorder %s16, 1
        %s197 = scalar_select %p196, %s16, 1
        %p198 = scmp.lt.s32.totalorder %s195, 3
        %s199 = scalar_select %p198, %s195, 3
        %p200 = scmp.lt.s32.totalorder %s18, 0
        %s201 = scalar_select %p200, %s18, 0
        %s202 = sadd.s32 %s201, %s199
        %s203 = smul.addr %s197, 4
        %s204 = sadd.s32 %s202, %s203
        %s205 = smul.addr %s204, 4
        %s206 = scalar_lea.vmem %s2, %s205
        %s207 = smul.u32 4, %s17
      $region28: #{mlm_transformer_forward.8} parent=15 // pred_fallthru
        _
    $region16: #{mlm_transformer_forward.8} parent=5 // pred_fallthru
      _
    %p208 = scmp.le.s32.totalorder 1, %s9
    %p209 = scmp.lt.s32.totalorder %s9, 3
    %p210 = pnand %p208, %p209
    %p211 = pneg %p210
    // Predicated region
    $region29: #{mlm_transformer_forward.8} parent=5 // pred_check
      _
    $region30: #{mlm_transformer_forward.8} parent=5 // pred_check_branch
      %213 = sbr.rel (%p210) target = $region32
    $region31: #{mlm_transformer_forward.8} parent=5 // pred_region
      %s214 = ssub.s32 %s9, 1
      %s215 = smul.u32 4, %s20
      %p216 = scmp.lt.s32.totalorder %s19, 1
      %s217 = scalar_select %p216, %s19, 1
      %p218 = scmp.lt.s32.totalorder %s215, 3
      %s219 = scalar_select %p218, %s215, 3
      %s220 = smul.addr %s217, 4
      %s221 = sadd.s32 %s219, %s220
      %s222 = smul.addr %s221, 4
      %s223 = scalar_lea.vmem %s0, %s222
      %p224 = pneg %p56
      %p225 = pneg %p53
      %s226 = smul.u32 4, %s20
      %p227 = scmp.lt.s32.totalorder %s19, 1
      %s228 = scalar_select %p227, %s19, 1
      %p229 = scmp.lt.s32.totalorder %s226, 3
      %s230 = scalar_select %p229, %s226, 3
      %p231 = scmp.lt.s32.totalorder %s21, 0
      %s232 = scalar_select %p231, %s21, 0
      %s233 = sadd.s32 %s232, %s230
      %s234 = smul.addr %s228, 4
      %s235 = sadd.s32 %s233, %s234
      %s236 = smul.addr %s235, 4
      %s237 = scalar_lea.vmem %s1, %s236
      %p238 = pneg %p86
      %p239 = pneg %p83
      %s240 = smul.u32 4, %s20
      %p241 = scmp.lt.s32.totalorder %s19, 1
      %s242 = scalar_select %p241, %s19, 1
      %p243 = scmp.lt.s32.totalorder %s240, 3
      %s244 = scalar_select %p243, %s240, 3
      %p245 = scmp.lt.s32.totalorder %s21, 0
      %s246 = scalar_select %p245, %s21, 0
      %s247 = sadd.s32 %s246, %s244
      %s248 = smul.addr %s242, 4
      %s249 = sadd.s32 %s247, %s248
      %s250 = smul.addr %s249, 4
      %s251 = scalar_lea.vmem %s2, %s250
      %p252 = pneg %p116
      %p253 = pneg %p113
      %p254 = pneg %p144
      %p255 = pneg %p141
      %p256 = scmp.lt.s32.totalorder %s19, 1
      %s257 = scalar_select %p256, %s19, 1
      %p258 = scmp.lt.s32.totalorder %s20, 0
      %s259 = scalar_select %p258, %s20, 0
      %s260 = sadd.s32 %s259, %s257
      %s261 = smul.addr %s260, 4
      %s262 = scalar_lea.vmem %s3, %s261
      %s263 = smul.u32 4, %s20
      %p264 = scmp.lt.s32.totalorder %s19, 1
      %s265 = scalar_select %p264, %s19, 1
      %p266 = scmp.lt.s32.totalorder %s263, 3
      %s267 = scalar_select %p266, %s263, 3
      %s268 = smul.addr %s265, 4
      %s269 = sadd.s32 %s267, %s268
      %s270 = smul.addr %s269, 4
      %s271 = scalar_lea.vmem %s0, %s270
      %s272 = smul.u32 4, %s20
      %s273 = smul.u32 4, %s20
      %p274 = scmp.lt.s32.totalorder %s19, 1
      %s275 = scalar_select %p274, %s19, 1
      %p276 = scmp.lt.s32.totalorder %s273, 3
      %s277 = scalar_select %p276, %s273, 3
      %p278 = scmp.lt.s32.totalorder %s21, 0
      %s279 = scalar_select %p278, %s21, 0
      %s280 = sadd.s32 %s279, %s277
      %s281 = smul.addr %s275, 4
      %s282 = sadd.s32 %s280, %s281
      %s283 = smul.addr %s282, 4
      %s284 = scalar_lea.vmem %s1, %s283
      %s285 = smul.u32 4, %s20
      %s286 = smul.u32 4, %s20
      %p287 = scmp.lt.s32.totalorder %s19, 1
      %s288 = scalar_select %p287, %s19, 1
      %p289 = scmp.lt.s32.totalorder %s286, 3
      %s290 = scalar_select %p289, %s286, 3
      %p291 = scmp.lt.s32.totalorder %s21, 0
      %s292 = scalar_select %p291, %s21, 0
      %s293 = sadd.s32 %s292, %s290
      %s294 = smul.addr %s288, 4
      %s295 = sadd.s32 %s293, %s294
      %s296 = smul.addr %s295, 4
      %s297 = scalar_lea.vmem %s2, %s296
      %s298 = smul.u32 4, %s20
      %p299 = scmp.lt.s32.totalorder %s19, 1
      %s300 = scalar_select %p299, %s19, 1
      %p301 = scmp.lt.s32.totalorder %s20, 0
      %s302 = scalar_select %p301, %s20, 0
      %s303 = sadd.s32 %s302, %s300
      %s304 = smul.addr %s303, 4
      %s305 = scalar_lea.vmem %s3, %s304
      %p307 = scmp.eq.s32.totalorder %s21, 0
      // Predicated region
      $region33: #{mlm_transformer_forward.8} parent=31 // pred_check
        %p308 = pneg %p307
      $region34: #{mlm_transformer_forward.8} parent=31 // pred_check_branch
        %310 = sbr.rel (%p308) target = $region36
      $region35: #{mlm_transformer_forward.8} parent=31 // pred_region
        %vm311 = vcmask 7168
        %312 = vst.msk [vmem:[#allocation2] sm:$0xff] %vm311, -inf
        %313 = vst.msk [vmem:[#allocation2 + $0x8] sm:$0xff] %vm311, -inf
        %314 = vst.msk [vmem:[#allocation2 + $0x10] sm:$0xff] %vm311, -inf
        %315 = vst.msk [vmem:[#allocation2 + $0x18] sm:$0xff] %vm311, -inf
        %316 = vst.msk [vmem:[#allocation3] sm:$0xff] %vm311, 0.0
        %317 = vst.msk [vmem:[#allocation3 + $0x8] sm:$0xff] %vm311, 0.0
        %318 = vst.msk [vmem:[#allocation3 + $0x10] sm:$0xff] %vm311, 0.0
        %319 = vst.msk [vmem:[#allocation3 + $0x18] sm:$0xff] %vm311, 0.0
        %vm320 = vcmask 64512
        %321 = vst.msk [vmem:[#allocation4] sm:$0xff] %vm320, 0.0
        %322 = vst.msk [vmem:[#allocation4 + $0x8] sm:$0xff] %vm320, 0.0
        %323 = vst.msk [vmem:[#allocation4 + $0x10] sm:$0xff] %vm320, 0.0
        %324 = vst.msk [vmem:[#allocation4 + $0x18] sm:$0xff] %vm320, 0.0
      $region36: #{mlm_transformer_forward.8} parent=31 // pred_fallthru
        _
      %v325 = vld [vmem:[%s271] sm:$0xf]
      %v326 = vld [vmem:[%s271 + $0x4] sm:$0xf]
      %v327 = vld [vmem:[%s271 + $0x8] sm:$0xf]
      %v328 = vld [vmem:[%s271 + $0xc] sm:$0xf]
      %v329 = vld [vmem:[%s284] sm:$0xf]
      %v330 = vld [vmem:[%s284 + $0x4] sm:$0xf]
      %v331 = vld [vmem:[%s284 + $0x8] sm:$0xf]
      %v332 = vld [vmem:[%s284 + $0xc] sm:$0xf]
      %v333 = vld [vmem:[%s297] sm:$0xf]
      %v334 = vld [vmem:[%s297 + $0x4] sm:$0xf]
      %v335 = vld [vmem:[%s297 + $0x8] sm:$0xf]
      %v336 = vld [vmem:[%s297 + $0xc] sm:$0xf]
      %vm337 = vcmask 64512
      %v339 = vsel %vm337, %v325, 0
      %v342 = vsel %vm337, %v329, 0
      %344 = vmatprep.subr.bf16.mxu0 0
      %345 = vmatpush1.bf16.xpose.msra.mxu0 0
      %346 = vmatprep.subr.bf16.mxu0 0
      %347 = vmatpush1.bf16.xpose.msra.mxu0 0
      %348 = vmatprep.subr.bf16.mxu0 0
      %349 = vmatpush1.bf16.xpose.msra.mxu0 0
      %350 = vmatprep.subr.bf16.mxu0 0
      %351 = vmatpush1.bf16.xpose.msra.mxu0 0
      %352 = vmatprep.subr.bf16.mxu0 0
      %353 = vmatpush1.bf16.xpose.msra.mxu0 0
      %354 = vmatprep.subr.bf16.mxu0 0
      %355 = vmatpush1.bf16.xpose.msra.mxu0 0
      %356 = vmatprep.subr.bf16.mxu0 0
      %357 = vmatpush1.bf16.xpose.msra.mxu0 0
      %358 = vmatprep.subr.bf16.mxu0 0
      %359 = vmatpush1.bf16.xpose.msra.mxu0 %v342
      %360 = vmatprep.subr.bf16.mxu0 0
      %361 = vmatpush2.bf16.xpose.msra.mxu0 0
      %362 = vmatprep.subr.bf16.mxu0 0
      %363 = vmatpush2.bf16.xpose.msra.mxu0 0
      %364 = vmatprep.subr.bf16.mxu0 0
      %365 = vmatpush2.bf16.xpose.msra.mxu0 0
      %366 = vmatprep.subr.bf16.mxu0 0
      %367 = vmatpush2.bf16.xpose.msra.mxu0 0
      %368 = vmatprep.subr.bf16.mxu0 0
      %369 = vmatpush2.bf16.xpose.msra.mxu0 0
      %370 = vmatprep.subr.bf16.mxu0 0
      %371 = vmatpush2.bf16.xpose.msra.mxu0 0
      %372 = vmatprep.subr.bf16.mxu0 0
      %373 = vmatpush2.bf16.xpose.msra.mxu0 0
      %374 = vmatprep.subr.bf16.mxu0 0
      %375 = vmatpush2.bf16.xpose.msra.mxu0 0
      %376 = vmatprep.mubr.bf16.mxu0 0
      %377 = vmatmul.mubr.bf16.gmra.mxu0 %v339
      %v378 = vpop.f32.mrf.mxu0
      %v379 = vadd.f32 0.0, %v378
      %v380 = vpop.f32.mrf.mxu0
      %v381 = vpop.f32.mrf.mxu0
      %v382 = vpop.f32.mrf.mxu0
      %383 = vdwg.mxu0
      %v385 = vsel %vm337, %v326, 0
      %v388 = vsel %vm337, %v330, 0
      %390 = vmatprep.subr.bf16.mxu0 0
      %391 = vmatpush1.bf16.xpose.msra.mxu0 0
      %392 = vmatprep.subr.bf16.mxu0 0
      %393 = vmatpush1.bf16.xpose.msra.mxu0 0
      %394 = vmatprep.subr.bf16.mxu0 0
      %395 = vmatpush1.bf16.xpose.msra.mxu0 0
      %396 = vmatprep.subr.bf16.mxu0 0
      %397 = vmatpush1.bf16.xpose.msra.mxu0 0
      %398 = vmatprep.subr.bf16.mxu0 0
      %399 = vmatpush1.bf16.xpose.msra.mxu0 0
      %400 = vmatprep.subr.bf16.mxu0 0
      %401 = vmatpush1.bf16.xpose.msra.mxu0 0
      %402 = vmatprep.subr.bf16.mxu0 0
      %403 = vmatpush1.bf16.xpose.msra.mxu0 0
      %404 = vmatprep.subr.bf16.mxu0 0
      %405 = vmatpush1.bf16.xpose.msra.mxu0 %v388
      %406 = vmatprep.subr.bf16.mxu0 0
      %407 = vmatpush2.bf16.xpose.msra.mxu0 0
      %408 = vmatprep.subr.bf16.mxu0 0
      %409 = vmatpush2.bf16.xpose.msra.mxu0 0
      %410 = vmatprep.subr.bf16.mxu0 0
      %411 = vmatpush2.bf16.xpose.msra.mxu0 0
      %412 = vmatprep.subr.bf16.mxu0 0
      %413 = vmatpush2.bf16.xpose.msra.mxu0 0
      %414 = vmatprep.subr.bf16.mxu0 0
      %415 = vmatpush2.bf16.xpose.msra.mxu0 0
      %416 = vmatprep.subr.bf16.mxu0 0
      %417 = vmatpush2.bf16.xpose.msra.mxu0 0
      %418 = vmatprep.subr.bf16.mxu0 0
      %419 = vmatpush2.bf16.xpose.msra.mxu0 0
      %420 = vmatprep.subr.bf16.mxu0 0
      %421 = vmatpush2.bf16.xpose.msra.mxu0 0
      %422 = vmatprep.mubr.bf16.mxu0 0
      %423 = vmatmul.mubr.bf16.gmra.mxu0 %v385
      %v424 = vpop.f32.mrf.mxu0
      %v425 = vadd.f32 0.0, %v424
      %v426 = vpop.f32.mrf.mxu0
      %v427 = vpop.f32.mrf.mxu0
      %v428 = vpop.f32.mrf.mxu0
      %429 = vdwg.mxu0
      %v431 = vsel %vm337, %v327, 0
      %v434 = vsel %vm337, %v331, 0
      %436 = vmatprep.subr.bf16.mxu0 0
      %437 = vmatpush1.bf16.xpose.msra.mxu0 0
      %438 = vmatprep.subr.bf16.mxu0 0
      %439 = vmatpush1.bf16.xpose.msra.mxu0 0
      %440 = vmatprep.subr.bf16.mxu0 0
      %441 = vmatpush1.bf16.xpose.msra.mxu0 0
      %442 = vmatprep.subr.bf16.mxu0 0
      %443 = vmatpush1.bf16.xpose.msra.mxu0 0
      %444 = vmatprep.subr.bf16.mxu0 0
      %445 = vmatpush1.bf16.xpose.msra.mxu0 0
      %446 = vmatprep.subr.bf16.mxu0 0
      %447 = vmatpush1.bf16.xpose.msra.mxu0 0
      %448 = vmatprep.subr.bf16.mxu0 0
      %449 = vmatpush1.bf16.xpose.msra.mxu0 0
      %450 = vmatprep.subr.bf16.mxu0 0
      %451 = vmatpush1.bf16.xpose.msra.mxu0 %v434
      %452 = vmatprep.subr.bf16.mxu0 0
      %453 = vmatpush2.bf16.xpose.msra.mxu0 0
      %454 = vmatprep.subr.bf16.mxu0 0
      %455 = vmatpush2.bf16.xpose.msra.mxu0 0
      %456 = vmatprep.subr.bf16.mxu0 0
      %457 = vmatpush2.bf16.xpose.msra.mxu0 0
      %458 = vmatprep.subr.bf16.mxu0 0
      %459 = vmatpush2.bf16.xpose.msra.mxu0 0
      %460 = vmatprep.subr.bf16.mxu0 0
      %461 = vmatpush2.bf16.xpose.msra.mxu0 0
      %462 = vmatprep.subr.bf16.mxu0 0
      %463 = vmatpush2.bf16.xpose.msra.mxu0 0
      %464 = vmatprep.subr.bf16.mxu0 0
      %465 = vmatpush2.bf16.xpose.msra.mxu0 0
      %466 = vmatprep.subr.bf16.mxu0 0
      %467 = vmatpush2.bf16.xpose.msra.mxu0 0
      %468 = vmatprep.mubr.bf16.mxu0 0
      %469 = vmatmul.mubr.bf16.gmra.mxu0 %v431
      %v470 = vpop.f32.mrf.mxu0
      %v471 = vadd.f32 0.0, %v470
      %v472 = vpop.f32.mrf.mxu0
      %v473 = vpop.f32.mrf.mxu0
      %v474 = vpop.f32.mrf.mxu0
      %475 = vdwg.mxu0
      %v477 = vsel %vm337, %v328, 0
      %v480 = vsel %vm337, %v332, 0
      %482 = vmatprep.subr.bf16.mxu0 0
      %483 = vmatpush1.bf16.xpose.msra.mxu0 0
      %484 = vmatprep.subr.bf16.mxu0 0
      %485 = vmatpush1.bf16.xpose.msra.mxu0 0
      %486 = vmatprep.subr.bf16.mxu0 0
      %487 = vmatpush1.bf16.xpose.msra.mxu0 0
      %488 = vmatprep.subr.bf16.mxu0 0
      %489 = vmatpush1.bf16.xpose.msra.mxu0 0
      %490 = vmatprep.subr.bf16.mxu0 0
      %491 = vmatpush1.bf16.xpose.msra.mxu0 0
      %492 = vmatprep.subr.bf16.mxu0 0
      %493 = vmatpush1.bf16.xpose.msra.mxu0 0
      %494 = vmatprep.subr.bf16.mxu0 0
      %495 = vmatpush1.bf16.xpose.msra.mxu0 0
      %496 = vmatprep.subr.bf16.mxu0 0
      %497 = vmatpush1.bf16.xpose.msra.mxu0 %v480
      %498 = vmatprep.subr.bf16.mxu0 0
      %499 = vmatpush2.bf16.xpose.msra.mxu0 0
      %500 = vmatprep.subr.bf16.mxu0 0
      %501 = vmatpush2.bf16.xpose.msra.mxu0 0
      %502 = vmatprep.subr.bf16.mxu0 0
      %503 = vmatpush2.bf16.xpose.msra.mxu0 0
      %504 = vmatprep.subr.bf16.mxu0 0
      %505 = vmatpush2.bf16.xpose.msra.mxu0 0
      %506 = vmatprep.subr.bf16.mxu0 0
      %507 = vmatpush2.bf16.xpose.msra.mxu0 0
      %508 = vmatprep.subr.bf16.mxu0 0
      %509 = vmatpush2.bf16.xpose.msra.mxu0 0
      %510 = vmatprep.subr.bf16.mxu0 0
      %511 = vmatpush2.bf16.xpose.msra.mxu0 0
      %512 = vmatprep.subr.bf16.mxu0 0
      %513 = vmatpush2.bf16.xpose.msra.mxu0 0
      %514 = vmatprep.mubr.bf16.mxu0 0
      %515 = vmatmul.mubr.bf16.gmra.mxu0 %v477
      %v516 = vpop.f32.mrf.mxu0
      %v517 = vadd.f32 0.0, %v516
      %v518 = vpop.f32.mrf.mxu0
      %v519 = vpop.f32.mrf.mxu0
      %v520 = vpop.f32.mrf.mxu0
      %521 = vdwg.mxu0
      %v522 = vmul.f32 %v379, 0.35355338
      %v523 = vmul.f32 %v425, 0.35355338
      %v524 = vmul.f32 %v471, 0.35355338
      %v525 = vmul.f32 %v517, 0.35355338
      %v526 = vld [vmem:[#allocation2] sm:$0xff]
      %v527 = vld [vmem:[#allocation2 + $0x8] sm:$0xff]
      %v528 = vld [vmem:[#allocation2 + $0x10] sm:$0xff]
      %v529 = vld [vmem:[#allocation2 + $0x18] sm:$0xff]
      %v530 = vsel %vm337, %v522, -inf
      %531 = vmax.xlane.f32.xlu0 %v530
      %v532 = vpop.xlane.xlu0 %531
      %v533 = vsel %vm337, %v523, -inf
      %534 = vmax.xlane.f32.xlu0 %v533
      %v535 = vpop.xlane.xlu0 %534
      %v536 = vsel %vm337, %v524, -inf
      %537 = vmax.xlane.f32.xlu0 %v536
      %v538 = vpop.xlane.xlu0 %537
      %v539 = vsel %vm337, %v525, -inf
      %540 = vmax.xlane.f32.xlu0 %v539
      %v541 = vpop.xlane.xlu0 %540
      %v542 = vmax.f32 %v526, %v532
      %v543 = vmax.f32 %v527, %v535
      %v544 = vmax.f32 %v528, %v538
      %v545 = vmax.f32 %v529, %v541
      %v546 = vsub.f32 %v526, %v542
      %v547 = vsub.f32 %v527, %v543
      %v548 = vsub.f32 %v528, %v544
      %v549 = vsub.f32 %v529, %v545
      %v550 = vmul.f32 %v546, 1.442695
      %v551 = vpow.pop %v550
      %v552 = vmul.f32 %v547, 1.442695
      %v553 = vpow.pop %v552
      %v554 = vmul.f32 %v548, 1.442695
      %v555 = vpow.pop %v554
      %v556 = vmul.f32 %v549, 1.442695
      %v557 = vpow.pop %v556
      %559 = vset.pattern.permute.xlu0 0
      %560 = vperm.xlu0 %559, %v542
      %v561 = vpop.permute.xlu0 %560
      %564 = vset.pattern.permute.xlu0 0
      %565 = vperm.xlu0 %564, %v543
      %v566 = vpop.permute.xlu0 %565
      %569 = vset.pattern.permute.xlu0 0
      %570 = vperm.xlu0 %569, %v544
      %v571 = vpop.permute.xlu0 %570
      %574 = vset.pattern.permute.xlu0 0
      %575 = vperm.xlu0 %574, %v545
      %v576 = vpop.permute.xlu0 %575
      %v578 = vsub.f32 %v522, %v561
      %v579 = vsub.f32 %v523, %v566
      %v580 = vsub.f32 %v524, %v571
      %v581 = vsub.f32 %v525, %v576
      %v582 = vmul.f32 %v578, 1.442695
      %v583 = vpow.pop %v582
      %v584 = vmul.f32 %v579, 1.442695
      %v585 = vpow.pop %v584
      %v586 = vmul.f32 %v580, 1.442695
      %v587 = vpow.pop %v586
      %v588 = vmul.f32 %v581, 1.442695
      %v589 = vpow.pop %v588
      %v590 = vld [vmem:[#allocation3] sm:$0xff]
      %v591 = vld [vmem:[#allocation3 + $0x8] sm:$0xff]
      %v592 = vld [vmem:[#allocation3 + $0x10] sm:$0xff]
      %v593 = vld [vmem:[#allocation3 + $0x18] sm:$0xff]
      %v594 = vmul.f32 %v551, %v590
      %v595 = vmul.f32 %v553, %v591
      %v596 = vmul.f32 %v555, %v592
      %v597 = vmul.f32 %v557, %v593
      %v598 = vsel %vm337, %v583, 0.0
      %599 = vadd.xlane.f32.xlu0 %v598
      %v600 = vpop.xlane.xlu0 %599
      %v601 = vsel %vm337, %v585, 0.0
      %602 = vadd.xlane.f32.xlu0 %v601
      %v603 = vpop.xlane.xlu0 %602
      %v604 = vsel %vm337, %v587, 0.0
      %605 = vadd.xlane.f32.xlu0 %v604
      %v606 = vpop.xlane.xlu0 %605
      %v607 = vsel %vm337, %v589, 0.0
      %608 = vadd.xlane.f32.xlu0 %v607
      %v609 = vpop.xlane.xlu0 %608
      %v610 = vadd.f32 %v594, %v600
      %v611 = vadd.f32 %v595, %v603
      %v612 = vadd.f32 %v596, %v606
      %v613 = vadd.f32 %v597, %v609
      %vm614 = vcmask 7168
      %615 = vst.msk [vmem:[#allocation3] sm:$0xff] %vm614, %v610
      %616 = vst.msk [vmem:[#allocation3 + $0x8] sm:$0xff] %vm614, %v611
      %617 = vst.msk [vmem:[#allocation3 + $0x10] sm:$0xff] %vm614, %v612
      %618 = vst.msk [vmem:[#allocation3 + $0x18] sm:$0xff] %vm614, %v613
      %v619 = vld [vmem:[#allocation4] sm:$0xff]
      %v620 = vld [vmem:[#allocation4 + $0x8] sm:$0xff]
      %v621 = vld [vmem:[#allocation4 + $0x10] sm:$0xff]
      %v622 = vld [vmem:[#allocation4 + $0x18] sm:$0xff]
      %624 = vset.pattern.permute.xlu0 0
      %625 = vperm.xlu0 %624, %v551
      %v626 = vpop.permute.xlu0 %625
      %629 = vset.pattern.permute.xlu0 0
      %630 = vperm.xlu0 %629, %v553
      %v631 = vpop.permute.xlu0 %630
      %634 = vset.pattern.permute.xlu0 0
      %635 = vperm.xlu0 %634, %v555
      %v636 = vpop.permute.xlu0 %635
      %639 = vset.pattern.permute.xlu0 0
      %640 = vperm.xlu0 %639, %v557
      %v641 = vpop.permute.xlu0 %640
      %v643 = vmul.f32 %v626, %v619
      %v644 = vmul.f32 %v631, %v620
      %v645 = vmul.f32 %v636, %v621
      %v646 = vmul.f32 %v641, %v622
      %v647 = vpack.c.bf16 %v583, %v583
      %v648 = vpack.c.bf16 %v585, %v585
      %v649 = vpack.c.bf16 %v587, %v587
      %v650 = vpack.c.bf16 %v589, %v589
      %v652 = vsel %vm337, %v647, 0
      %vm654 = vcmask 1043456
      %v656 = vsel %vm654, %v333, 0
      %658 = vmatprep.subr.bf16.mxu0 0
      %659 = vmatpush1.bf16.msra.mxu0 0
      %660 = vmatprep.subr.bf16.mxu0 0
      %661 = vmatpush1.bf16.msra.mxu0 0
      %662 = vmatprep.subr.bf16.mxu0 0
      %663 = vmatpush1.bf16.msra.mxu0 0
      %664 = vmatprep.subr.bf16.mxu0 0
      %665 = vmatpush1.bf16.msra.mxu0 0
      %666 = vmatprep.subr.bf16.mxu0 0
      %667 = vmatpush1.bf16.msra.mxu0 0
      %668 = vmatprep.subr.bf16.mxu0 0
      %669 = vmatpush1.bf16.msra.mxu0 0
      %670 = vmatprep.subr.bf16.mxu0 0
      %671 = vmatpush1.bf16.msra.mxu0 0
      %672 = vmatprep.subr.bf16.mxu0 0
      %673 = vmatpush1.bf16.msra.mxu0 %v656
      %674 = vmatprep.subr.bf16.mxu0 0
      %675 = vmatpush2.bf16.msra.mxu0 0
      %676 = vmatprep.subr.bf16.mxu0 0
      %677 = vmatpush2.bf16.msra.mxu0 0
      %678 = vmatprep.subr.bf16.mxu0 0
      %679 = vmatpush2.bf16.msra.mxu0 0
      %680 = vmatprep.subr.bf16.mxu0 0
      %681 = vmatpush2.bf16.msra.mxu0 0
      %682 = vmatprep.subr.bf16.mxu0 0
      %683 = vmatpush2.bf16.msra.mxu0 0
      %684 = vmatprep.subr.bf16.mxu0 0
      %685 = vmatpush2.bf16.msra.mxu0 0
      %686 = vmatprep.subr.bf16.mxu0 0
      %687 = vmatpush2.bf16.msra.mxu0 0
      %688 = vmatprep.subr.bf16.mxu0 0
      %689 = vmatpush2.bf16.msra.mxu0 0
      %690 = vmatprep.mubr.bf16.mxu0 0
      %691 = vmatmul.mubr.bf16.gmra.mxu0 %v652
      %v692 = vpop.f32.mrf.mxu0
      %v693 = vadd.f32 0.0, %v692
      %v694 = vpop.f32.mrf.mxu0
      %v695 = vpop.f32.mrf.mxu0
      %v696 = vpop.f32.mrf.mxu0
      %697 = vdwg.mxu0
      %v699 = vsel %vm337, %v648, 0
      %v702 = vsel %vm654, %v334, 0
      %704 = vmatprep.subr.bf16.mxu0 0
      %705 = vmatpush1.bf16.msra.mxu0 0
      %706 = vmatprep.subr.bf16.mxu0 0
      %707 = vmatpush1.bf16.msra.mxu0 0
      %708 = vmatprep.subr.bf16.mxu0 0
      %709 = vmatpush1.bf16.msra.mxu0 0
      %710 = vmatprep.subr.bf16.mxu0 0
      %711 = vmatpush1.bf16.msra.mxu0 0
      %712 = vmatprep.subr.bf16.mxu0 0
      %713 = vmatpush1.bf16.msra.mxu0 0
      %714 = vmatprep.subr.bf16.mxu0 0
      %715 = vmatpush1.bf16.msra.mxu0 0
      %716 = vmatprep.subr.bf16.mxu0 0
      %717 = vmatpush1.bf16.msra.mxu0 0
      %718 = vmatprep.subr.bf16.mxu0 0
      %719 = vmatpush1.bf16.msra.mxu0 %v702
      %720 = vmatprep.subr.bf16.mxu0 0
      %721 = vmatpush2.bf16.msra.mxu0 0
      %722 = vmatprep.subr.bf16.mxu0 0
      %723 = vmatpush2.bf16.msra.mxu0 0
      %724 = vmatprep.subr.bf16.mxu0 0
      %725 = vmatpush2.bf16.msra.mxu0 0
      %726 = vmatprep.subr.bf16.mxu0 0
      %727 = vmatpush2.bf16.msra.mxu0 0
      %728 = vmatprep.subr.bf16.mxu0 0
      %729 = vmatpush2.bf16.msra.mxu0 0
      %730 = vmatprep.subr.bf16.mxu0 0
      %731 = vmatpush2.bf16.msra.mxu0 0
      %732 = vmatprep.subr.bf16.mxu0 0
      %733 = vmatpush2.bf16.msra.mxu0 0
      %734 = vmatprep.subr.bf16.mxu0 0
      %735 = vmatpush2.bf16.msra.mxu0 0
      %736 = vmatprep.mubr.bf16.mxu0 0
      %737 = vmatmul.mubr.bf16.gmra.mxu0 %v699
      %v738 = vpop.f32.mrf.mxu0
      %v739 = vadd.f32 0.0, %v738
      %v740 = vpop.f32.mrf.mxu0
      %v741 = vpop.f32.mrf.mxu0
      %v742 = vpop.f32.mrf.mxu0
      %743 = vdwg.mxu0
      %v745 = vsel %vm337, %v649, 0
      %v748 = vsel %vm654, %v335, 0
      %750 = vmatprep.subr.bf16.mxu0 0
      %751 = vmatpush1.bf16.msra.mxu0 0
      %752 = vmatprep.subr.bf16.mxu0 0
      %753 = vmatpush1.bf16.msra.mxu0 0
      %754 = vmatprep.subr.bf16.mxu0 0
      %755 = vmatpush1.bf16.msra.mxu0 0
      %756 = vmatprep.subr.bf16.mxu0 0
      %757 = vmatpush1.bf16.msra.mxu0 0
      %758 = vmatprep.subr.bf16.mxu0 0
      %759 = vmatpush1.bf16.msra.mxu0 0
      %760 = vmatprep.subr.bf16.mxu0 0
      %761 = vmatpush1.bf16.msra.mxu0 0
      %762 = vmatprep.subr.bf16.mxu0 0
      %763 = vmatpush1.bf16.msra.mxu0 0
      %764 = vmatprep.subr.bf16.mxu0 0
      %765 = vmatpush1.bf16.msra.mxu0 %v748
      %766 = vmatprep.subr.bf16.mxu0 0
      %767 = vmatpush2.bf16.msra.mxu0 0
      %768 = vmatprep.subr.bf16.mxu0 0
      %769 = vmatpush2.bf16.msra.mxu0 0
      %770 = vmatprep.subr.bf16.mxu0 0
      %771 = vmatpush2.bf16.msra.mxu0 0
      %772 = vmatprep.subr.bf16.mxu0 0
      %773 = vmatpush2.bf16.msra.mxu0 0
      %774 = vmatprep.subr.bf16.mxu0 0
      %775 = vmatpush2.bf16.msra.mxu0 0
      %776 = vmatprep.subr.bf16.mxu0 0
      %777 = vmatpush2.bf16.msra.mxu0 0
      %778 = vmatprep.subr.bf16.mxu0 0
      %779 = vmatpush2.bf16.msra.mxu0 0
      %780 = vmatprep.subr.bf16.mxu0 0
      %781 = vmatpush2.bf16.msra.mxu0 0
      %782 = vmatprep.mubr.bf16.mxu0 0
      %783 = vmatmul.mubr.bf16.gmra.mxu0 %v745
      %v784 = vpop.f32.mrf.mxu0
      %v785 = vadd.f32 0.0, %v784
      %v786 = vpop.f32.mrf.mxu0
      %v787 = vpop.f32.mrf.mxu0
      %v788 = vpop.f32.mrf.mxu0
      %789 = vdwg.mxu0
      %v791 = vsel %vm337, %v650, 0
      %v794 = vsel %vm654, %v336, 0
      %796 = vmatprep.subr.bf16.mxu0 0
      %797 = vmatpush1.bf16.msra.mxu0 0
      %798 = vmatprep.subr.bf16.mxu0 0
      %799 = vmatpush1.bf16.msra.mxu0 0
      %800 = vmatprep.subr.bf16.mxu0 0
      %801 = vmatpush1.bf16.msra.mxu0 0
      %802 = vmatprep.subr.bf16.mxu0 0
      %803 = vmatpush1.bf16.msra.mxu0 0
      %804 = vmatprep.subr.bf16.mxu0 0
      %805 = vmatpush1.bf16.msra.mxu0 0
      %806 = vmatprep.subr.bf16.mxu0 0
      %807 = vmatpush1.bf16.msra.mxu0 0
      %808 = vmatprep.subr.bf16.mxu0 0
      %809 = vmatpush1.bf16.msra.mxu0 0
      %810 = vmatprep.subr.bf16.mxu0 0
      %811 = vmatpush1.bf16.msra.mxu0 %v794
      %812 = vmatprep.subr.bf16.mxu0 0
      %813 = vmatpush2.bf16.msra.mxu0 0
      %814 = vmatprep.subr.bf16.mxu0 0
      %815 = vmatpush2.bf16.msra.mxu0 0
      %816 = vmatprep.subr.bf16.mxu0 0
      %817 = vmatpush2.bf16.msra.mxu0 0
      %818 = vmatprep.subr.bf16.mxu0 0
      %819 = vmatpush2.bf16.msra.mxu0 0
      %820 = vmatprep.subr.bf16.mxu0 0
      %821 = vmatpush2.bf16.msra.mxu0 0
      %822 = vmatprep.subr.bf16.mxu0 0
      %823 = vmatpush2.bf16.msra.mxu0 0
      %824 = vmatprep.subr.bf16.mxu0 0
      %825 = vmatpush2.bf16.msra.mxu0 0
      %826 = vmatprep.subr.bf16.mxu0 0
      %827 = vmatpush2.bf16.msra.mxu0 0
      %828 = vmatprep.mubr.bf16.mxu0 0
      %829 = vmatmul.mubr.bf16.gmra.mxu0 %v791
      %v830 = vpop.f32.mrf.mxu0
      %v831 = vadd.f32 0.0, %v830
      %v832 = vpop.f32.mrf.mxu0
      %v833 = vpop.f32.mrf.mxu0
      %v834 = vpop.f32.mrf.mxu0
      %835 = vdwg.mxu0
      %v836 = vadd.f32 %v643, %v693
      %v837 = vadd.f32 %v644, %v739
      %v838 = vadd.f32 %v645, %v785
      %v839 = vadd.f32 %v646, %v831
      %840 = vst.msk [vmem:[#allocation4] sm:$0xff] %vm337, %v836
      %841 = vst.msk [vmem:[#allocation4 + $0x8] sm:$0xff] %vm337, %v837
      %842 = vst.msk [vmem:[#allocation4 + $0x10] sm:$0xff] %vm337, %v838
      %843 = vst.msk [vmem:[#allocation4 + $0x18] sm:$0xff] %vm337, %v839
      %844 = vst.msk [vmem:[#allocation2] sm:$0xff] %vm614, %v542
      %845 = vst.msk [vmem:[#allocation2 + $0x8] sm:$0xff] %vm614, %v543
      %846 = vst.msk [vmem:[#allocation2 + $0x10] sm:$0xff] %vm614, %v544
      %847 = vst.msk [vmem:[#allocation2 + $0x18] sm:$0xff] %vm614, %v545
      // Predicated region
      $region37: #{mlm_transformer_forward.8} parent=31 // pred_check
        %p848 = pneg %p307
      $region38: #{mlm_transformer_forward.8} parent=31 // pred_check_branch
        %850 = sbr.rel (%p848) target = $region40
      $region39: #{mlm_transformer_forward.8} parent=31 // pred_region
        %v851 = vld [vmem:[#allocation4] sm:$0xff]
        %v852 = vld [vmem:[#allocation4 + $0x8] sm:$0xff]
        %v853 = vld [vmem:[#allocation4 + $0x10] sm:$0xff]
        %v854 = vld [vmem:[#allocation4 + $0x18] sm:$0xff]
        %v855 = vld [vmem:[#allocation3] sm:$0xff]
        %v856 = vld [vmem:[#allocation3 + $0x8] sm:$0xff]
        %v857 = vld [vmem:[#allocation3 + $0x10] sm:$0xff]
        %v858 = vld [vmem:[#allocation3 + $0x18] sm:$0xff]
        %v859 = vrcp.pop %v855
        %v860 = vrcp.pop %v856
        %v861 = vrcp.pop %v857
        %v862 = vrcp.pop %v858
        %864 = vset.pattern.permute.xlu0 0
        %865 = vperm.xlu0 %864, %v859
        %v866 = vpop.permute.xlu0 %865
        %869 = vset.pattern.permute.xlu0 0
        %870 = vperm.xlu0 %869, %v860
        %v871 = vpop.permute.xlu0 %870
        %874 = vset.pattern.permute.xlu0 0
        %875 = vperm.xlu0 %874, %v861
        %v876 = vpop.permute.xlu0 %875
        %879 = vset.pattern.permute.xlu0 0
        %880 = vperm.xlu0 %879, %v862
        %v881 = vpop.permute.xlu0 %880
        %v883 = vmul.f32 %v851, %v866
        %v884 = vmul.f32 %v852, %v871
        %v885 = vmul.f32 %v853, %v876
        %v886 = vmul.f32 %v854, %v881
        %v887 = vpack.c.bf16 %v883, %v883
        %vm888 = vcmask 60416
        %889 = vst.msk [vmem:[%s305] sm:$0xf] %vm888, %v887
        %v890 = vpack.c.bf16 %v884, %v884
        %v892 = vunpack.c.l.b16 %v890
        %v893 = vpack.c.b16 %v892, %v892
        %894 = vrot.lane.b32.xlu0 %v893, 8
        %v895 = vpop.permute.xlu0 %894
        %vm897 = vcmask 126016
        %898 = vst.msk [vmem:[%s305] sm:$0xf] %vm897, %v895
        %v899 = vpack.c.bf16 %v885, %v885
        %v901 = vunpack.c.l.b16 %v899
        %v902 = vpack.c.b16 %v901, %v901
        %903 = vrot.lane.b32.xlu0 %v902, 16
        %v904 = vpop.permute.xlu0 %903
        %vm906 = vcmask 191616
        %907 = vst.msk [vmem:[%s305] sm:$0xf] %vm906, %v904
        %v908 = vpack.c.bf16 %v886, %v886
        %v910 = vunpack.c.l.b16 %v908
        %v911 = vpack.c.b16 %v910, %v910
        %912 = vrot.lane.b32.xlu0 %v911, 24
        %v913 = vpop.permute.xlu0 %912
        %vm915 = vcmask 257216
        %916 = vst.msk [vmem:[%s305] sm:$0xf] %vm915, %v913
      $region40: #{mlm_transformer_forward.8} parent=31 // pred_fallthru
        _
      %p917 = scmp.lt.s32.totalorder %s19, 1
      %s918 = scalar_select %p917, %s19, 1
      %p919 = scmp.lt.s32.totalorder %s20, 0
      %s920 = scalar_select %p919, %s20, 0
      %s921 = sadd.s32 %s920, %s918
      %s922 = smul.addr %s921, 4
      %s923 = scalar_lea.vmem %s3, %s922
      // Predicated region
      $region41: #{mlm_transformer_forward.8} parent=31 // pred_check
        %p924 = pneg %p141
      $region42: #{mlm_transformer_forward.8} parent=31 // pred_check_branch
        %926 = sbr.rel (%p924) target = $region44
      $region43: #{mlm_transformer_forward.8} parent=31 // pred_region
        _
      $region44: #{mlm_transformer_forward.8} parent=31 // pred_fallthru
        _
    $region32: #{mlm_transformer_forward.8} parent=5 // pred_fallthru
      _
    %p927 = scmp.le.s32.totalorder 2, %s9
    // Predicated region
    $region45: #{mlm_transformer_forward.8} parent=5 // pred_check
      %p928 = pneg %p927
    $region46: #{mlm_transformer_forward.8} parent=5 // pred_check_branch
      %930 = sbr.rel (%p928) target = $region48
    $region47: #{mlm_transformer_forward.8} parent=5 // pred_region
      %s931 = ssub.s32 %s9, 2
      // Predicated region
      $region49: #{mlm_transformer_forward.8} parent=47 // pred_check
        %p932 = pneg %p147
      $region50: #{mlm_transformer_forward.8} parent=47 // pred_check_branch
        %934 = sbr.rel (%p932) target = $region52
      $region51: #{mlm_transformer_forward.8} parent=47 // pred_region
        %p935 = scmp.lt.s32.totalorder %s22, 1
        %s936 = scalar_select %p935, %s22, 1
        %p937 = scmp.lt.s32.totalorder %s23, 0
        %s938 = scalar_select %p937, %s23, 0
        %s939 = sadd.s32 %s938, %s936
        %s940 = smul.addr %s939, 4
        %s941 = scalar_lea.vmem %s3, %s940
      $region52: #{mlm_transformer_forward.8} parent=47 // pred_fallthru
        _
    $region48: #{mlm_transformer_forward.8} parent=5 // pred_fallthru
      _
  $region6: #{mlm_transformer_forward.8} parent=0 // loop_footer
    %s13 = sadd.s32 1, %s9
  $region7: #{mlm_transformer_forward.8} parent=0 // loop_footer_branch
    %8 = sbr.rel target = $region3
  $region8: #{mlm_transformer_forward.8} parent=0 // loop_exit
    _

// kernel: mlm_transformer_forward.9
$region0: #{mlm_transformer_forward.9}
  #allocation0 [shape = 'u32[]', space=smem, size = 0x4, offset = 0x4, fixed_abs, tag = 'smem constant byte address 0x4 - core index']
  #allocation1 [shape = 'u32[144,128]{1,0:T(1,128)}', space=vmem, size = 0x12000, scoped, tag = 'internal scratch']
  %s0 = inlined_call_operand.vmem [shape: bf16[16,32], index: 0, kind: input, shape index: {}]
  %s1 = inlined_call_operand.vmem [shape: bf16[16,32], index: 1, kind: input, shape index: {}]
  %s2 = inlined_call_operand.vmem [shape: bf16[32,32], index: 2, kind: input, shape index: {}]
  %s3 = inlined_call_operand.vmem [shape: f32[1,32], index: 3, kind: input, shape index: {}]
  %s4 = inlined_call_operand.vmem [shape: f32[1,32], index: 4, kind: input, shape index: {}]
  %s5 = inlined_call_operand.vmem [shape: f32[1,32], index: 5, kind: input, shape index: {}]
  %s6 = inlined_call_operand.vmem [shape: bf16[32,64], index: 6, kind: input, shape index: {}]
  %s7 = inlined_call_operand.vmem [shape: f32[1,64], index: 7, kind: input, shape index: {}]
  %s8 = inlined_call_operand.vmem [shape: bf16[64,32], index: 8, kind: input, shape index: {}]
  %s9 = inlined_call_operand.vmem [shape: f32[1,32], index: 9, kind: input, shape index: {}]
  %s10 = inlined_call_operand.vmem [shape: f32[1,32], index: 10, kind: input, shape index: {}]
  %s11 = inlined_call_operand.vmem [shape: f32[1,32], index: 11, kind: input, shape index: {}]
  %s12 = inlined_call_operand.vmem [shape: bf16[16,32], index: 12, kind: output, shape index: {}]
  %s13 = sld [smem:[#allocation0]]
  $region58: #{mlm_transformer_forward.9} parent=0
    _
  %s15 = ssub.s32 1, %s13
  %s16 = scalar_select 0, %s15, %s13
  // Predicated region
  $region2: #{mlm_transformer_forward.9} parent=0 // pred_check
    _
  $region3: #{mlm_transformer_forward.9} parent=0 // pred_check_branch
    %18 = sbr.rel (0) target = $region5
  $region4: #{mlm_transformer_forward.9} parent=0 // pred_region
    _
  $region5: #{mlm_transformer_forward.9} parent=0 // pred_fallthru
    _
  // Predicated region
  $region6: #{mlm_transformer_forward.9} parent=0 // pred_check
    _
  $region7: #{mlm_transformer_forward.9} parent=0 // pred_check_branch
    %20 = sbr.rel (0) target = $region9
  $region8: #{mlm_transformer_forward.9} parent=0 // pred_region
    _
  $region9: #{mlm_transformer_forward.9} parent=0 // pred_fallthru
    _
  // Predicated region
  $region10: #{mlm_transformer_forward.9} parent=0 // pred_check
    _
  $region11: #{mlm_transformer_forward.9} parent=0 // pred_check_branch
    %22 = sbr.rel (0) target = $region13
  $region12: #{mlm_transformer_forward.9} parent=0 // pred_region
    _
  $region13: #{mlm_transformer_forward.9} parent=0 // pred_fallthru
    _
  // Predicated region
  $region14: #{mlm_transformer_forward.9} parent=0 // pred_check
    _
  $region15: #{mlm_transformer_forward.9} parent=0 // pred_check_branch
    %24 = sbr.rel (0) target = $region17
  $region16: #{mlm_transformer_forward.9} parent=0 // pred_region
    _
  $region17: #{mlm_transformer_forward.9} parent=0 // pred_fallthru
    _
  // Predicated region
  $region18: #{mlm_transformer_forward.9} parent=0 // pred_check
    _
  $region19: #{mlm_transformer_forward.9} parent=0 // pred_check_branch
    %26 = sbr.rel (0) target = $region21
  $region20: #{mlm_transformer_forward.9} parent=0 // pred_region
    _
  $region21: #{mlm_transformer_forward.9} parent=0 // pred_fallthru
    _
  // Predicated region
  $region22: #{mlm_transformer_forward.9} parent=0 // pred_check
    _
  $region23: #{mlm_transformer_forward.9} parent=0 // pred_check_branch
    %28 = sbr.rel (0) target = $region25
  $region24: #{mlm_transformer_forward.9} parent=0 // pred_region
    _
  $region25: #{mlm_transformer_forward.9} parent=0 // pred_fallthru
    _
  // Predicated region
  $region26: #{mlm_transformer_forward.9} parent=0 // pred_check
    _
  $region27: #{mlm_transformer_forward.9} parent=0 // pred_check_branch
    %30 = sbr.rel (0) target = $region29
  $region28: #{mlm_transformer_forward.9} parent=0 // pred_region
    _
  $region29: #{mlm_transformer_forward.9} parent=0 // pred_fallthru
    _
  // Predicated region
  $region30: #{mlm_transformer_forward.9} parent=0 // pred_check
    _
  $region31: #{mlm_transformer_forward.9} parent=0 // pred_check_branch
    %32 = sbr.rel (0) target = $region33
  $region32: #{mlm_transformer_forward.9} parent=0 // pred_region
    _
  $region33: #{mlm_transformer_forward.9} parent=0 // pred_fallthru
    _
  // Predicated region
  $region34: #{mlm_transformer_forward.9} parent=0 // pred_check
    _
  $region35: #{mlm_transformer_forward.9} parent=0 // pred_check_branch
    %34 = sbr.rel (0) target = $region37
  $region36: #{mlm_transformer_forward.9} parent=0 // pred_region
    _
  $region37: #{mlm_transformer_forward.9} parent=0 // pred_fallthru
    _
  // Predicated region
  $region38: #{mlm_transformer_forward.9} parent=0 // pred_check
    _
  $region39: #{mlm_transformer_forward.9} parent=0 // pred_check_branch
    %36 = sbr.rel (0) target = $region41
  $region40: #{mlm_transformer_forward.9} parent=0 // pred_region
    _
  $region41: #{mlm_transformer_forward.9} parent=0 // pred_fallthru
    _
  // Predicated region
  $region42: #{mlm_transformer_forward.9} parent=0 // pred_check
    _
  $region43: #{mlm_transformer_forward.9} parent=0 // pred_check_branch
    %38 = sbr.rel (0) target = $region45
  $region44: #{mlm_transformer_forward.9} parent=0 // pred_region
    _
  $region45: #{mlm_transformer_forward.9} parent=0 // pred_fallthru
    _
  // Predicated region
  $region46: #{mlm_transformer_forward.9} parent=0 // pred_check
    _
  $region47: #{mlm_transformer_forward.9} parent=0 // pred_check_branch
    %40 = sbr.rel (0) target = $region49
  $region48: #{mlm_transformer_forward.9} parent=0 // pred_region
    _
  $region49: #{mlm_transformer_forward.9} parent=0 // pred_fallthru
    _
  %v42 = vld [vmem:[%s0] sm:$0xf]
  %v43 = vld [vmem:[%s0 + $0x4] sm:$0xf]
  %v44 = vunpack.c.l.bf16 %v42
  %v45 = vunpack.c.l.bf16 %v43
  %v46 = vld [vmem:[%s1] sm:$0xf]
  %v47 = vld [vmem:[%s1 + $0x4] sm:$0xf]
  %v48 = vld [vmem:[%s2] sm:$0xf]
  %v49 = vld [vmem:[%s2 + $0x4] sm:$0xf]
  %v50 = vld [vmem:[%s2 + $0x8] sm:$0xf]
  %v51 = vld [vmem:[%s2 + $0xc] sm:$0xf]
  %v52 = vld [vmem:[%s3] sm:$0x1]
  %v54 = vlaneseq
  %v55 = vshrl.u32 %v54, 7
  %v56 = vsub.s32 0, %v55
  %v57 = vrot.slane %v52, %v56
  %v61 = vunpack.c.l.b16 %v46
  %v62 = vunpack.c.l.b16 %v47
  %v63 = vpack.c.b16 %v62, %v61
  %v68 = vunpack.c.l.b16 %v48
  %v69 = vunpack.c.l.b16 %v49
  %v70 = vunpack.c.l.b16 %v50
  %v71 = vunpack.c.l.b16 %v51
  %v72 = vpack.c.b16 %v69, %v68
  %v73 = vpack.c.b16 %v71, %v70
  %vm76 = vcmask 261120
  %v78 = vsel %vm76, %v63, 0
  %80 = vmatprep.subr.bf16.mxu0 0
  %81 = vmatpush1.bf16.msra.mxu0 0
  %82 = vmatprep.subr.bf16.mxu0 0
  %83 = vmatpush1.bf16.msra.mxu0 0
  %84 = vmatprep.subr.bf16.mxu0 0
  %85 = vmatpush1.bf16.msra.mxu0 0
  %86 = vmatprep.subr.bf16.mxu0 0
  %87 = vmatpush1.bf16.msra.mxu0 0
  %88 = vmatprep.subr.bf16.mxu0 0
  %89 = vmatpush1.bf16.msra.mxu0 0
  %90 = vmatprep.subr.bf16.mxu0 0
  %91 = vmatpush1.bf16.msra.mxu0 0
  %92 = vmatprep.subr.bf16.mxu0 0
  %93 = vmatpush1.bf16.msra.mxu0 %v73
  %94 = vmatprep.subr.bf16.mxu0 0
  %95 = vmatpush1.bf16.msra.mxu0 %v72
  %96 = vmatprep.subr.bf16.mxu0 0
  %97 = vmatpush2.bf16.msra.mxu0 0
  %98 = vmatprep.subr.bf16.mxu0 0
  %99 = vmatpush2.bf16.msra.mxu0 0
  %100 = vmatprep.subr.bf16.mxu0 0
  %101 = vmatpush2.bf16.msra.mxu0 0
  %102 = vmatprep.subr.bf16.mxu0 0
  %103 = vmatpush2.bf16.msra.mxu0 0
  %104 = vmatprep.subr.bf16.mxu0 0
  %105 = vmatpush2.bf16.msra.mxu0 0
  %106 = vmatprep.subr.bf16.mxu0 0
  %107 = vmatpush2.bf16.msra.mxu0 0
  %108 = vmatprep.subr.bf16.mxu0 0
  %109 = vmatpush2.bf16.msra.mxu0 0
  %110 = vmatprep.subr.bf16.mxu0 0
  %111 = vmatpush2.bf16.msra.mxu0 0
  %112 = vmatprep.mubr.bf16.mxu0 0
  %113 = vmatmul.mubr.bf16.gmra.mxu0 %v78
  %v114 = vpop.f32.mrf.mxu0
  %v115 = vadd.f32 %v57, %v114
  %v116 = vpop.f32.mrf.mxu0
  %v117 = vpop.f32.mrf.mxu0
  %v118 = vadd.f32 %v57, %v117
  %v119 = vpop.f32.mrf.mxu0
  %120 = vdwg.mxu0
  %v121 = vadd.f32 %v44, %v115
  %v122 = vadd.f32 %v45, %v118
  %v123 = vld [vmem:[%s4] sm:$0x1]
  %v124 = vld [vmem:[%s5] sm:$0x1]
  %v125 = vsel %vm76, %v121, 0.0
  %126 = vadd.xlane.f32.xlu0 %v125
  %v127 = vpop.xlane.xlu0 %126
  %v128 = vsel %vm76, %v122, 0.0
  %129 = vadd.xlane.f32.xlu0 %v128
  %v130 = vpop.xlane.xlu0 %129
  %v131 = vrcp.pop 32.0
  %v132 = vmul.f32 %v127, %v131
  %v133 = vmul.f32 %v130, %v131
  %v134 = vsub.f32 %v121, %v132
  %v135 = vsub.f32 %v122, %v133
  %v136 = vmul.f32 %v134, %v134
  %v137 = vmul.f32 %v135, %v135
  %v138 = vsel %vm76, %v136, 0.0
  %139 = vadd.xlane.f32.xlu0 %v138
  %v140 = vpop.xlane.xlu0 %139
  %v141 = vsel %vm76, %v137, 0.0
  %142 = vadd.xlane.f32.xlu0 %v141
  %v143 = vpop.xlane.xlu0 %142
  %v144 = vmul.f32 %v140, %v131
  %v145 = vmul.f32 %v143, %v131
  %v146 = vadd.f32 %v144, 1e-05
  %v147 = vadd.f32 %v145, 1e-05
  %v148 = vrsqrt.pop %v146
  %v149 = vrsqrt.pop %v147
  %v150 = vmul.f32 %v134, %v148
  %v151 = vmul.f32 %v135, %v149
  %v153 = vlaneseq
  %v154 = vshrl.u32 %v153, 7
  %v155 = vsub.s32 0, %v154
  %v156 = vrot.slane %v123, %v155
  %v158 = vmul.f32 %v150, %v156
  %v159 = vmul.f32 %v151, %v156
  %v161 = vlaneseq
  %v162 = vshrl.u32 %v161, 7
  %v163 = vsub.s32 0, %v162
  %v164 = vrot.slane %v124, %v163
  %v166 = vadd.f32 %v158, %v164
  %v167 = vadd.f32 %v159, %v164
  %v168 = vpack.c.bf16 %v167, %v166
  %v169 = vld [vmem:[%s6] sm:$0xf]
  %v170 = vld [vmem:[%s6 + $0x4] sm:$0xf]
  %v171 = vld [vmem:[%s6 + $0x8] sm:$0xf]
  %v172 = vld [vmem:[%s6 + $0xc] sm:$0xf]
  %v173 = vld [vmem:[%s7] sm:$0x1]
  %v175 = vlaneseq
  %v176 = vshrl.u32 %v175, 7
  %v177 = vsub.s32 0, %v176
  %v178 = vrot.slane %v173, %v177
  %v184 = vunpack.c.l.b16 %v169
  %v185 = vunpack.c.l.b16 %v170
  %v186 = vunpack.c.l.b16 %v171
  %v187 = vunpack.c.l.b16 %v172
  %v188 = vpack.c.b16 %v185, %v184
  %v189 = vpack.c.b16 %v187, %v186
  %v193 = vsel %vm76, %v168, 0
  %195 = vmatprep.subr.bf16.mxu0 0
  %196 = vmatpush1.bf16.msra.mxu0 0
  %197 = vmatprep.subr.bf16.mxu0 0
  %198 = vmatpush1.bf16.msra.mxu0 0
  %199 = vmatprep.subr.bf16.mxu0 0
  %200 = vmatpush1.bf16.msra.mxu0 0
  %201 = vmatprep.subr.bf16.mxu0 0
  %202 = vmatpush1.bf16.msra.mxu0 0
  %203 = vmatprep.subr.bf16.mxu0 0
  %204 = vmatpush1.bf16.msra.mxu0 0
  %205 = vmatprep.subr.bf16.mxu0 0
  %206 = vmatpush1.bf16.msra.mxu0 0
  %207 = vmatprep.subr.bf16.mxu0 0
  %208 = vmatpush1.bf16.msra.mxu0 %v189
  %209 = vmatprep.subr.bf16.mxu0 0
  %210 = vmatpush1.bf16.msra.mxu0 %v188
  %211 = vmatprep.subr.bf16.mxu0 0
  %212 = vmatpush2.bf16.msra.mxu0 0
  %213 = vmatprep.subr.bf16.mxu0 0
  %214 = vmatpush2.bf16.msra.mxu0 0
  %215 = vmatprep.subr.bf16.mxu0 0
  %216 = vmatpush2.bf16.msra.mxu0 0
  %217 = vmatprep.subr.bf16.mxu0 0
  %218 = vmatpush2.bf16.msra.mxu0 0
  %219 = vmatprep.subr.bf16.mxu0 0
  %220 = vmatpush2.bf16.msra.mxu0 0
  %221 = vmatprep.subr.bf16.mxu0 0
  %222 = vmatpush2.bf16.msra.mxu0 0
  %223 = vmatprep.subr.bf16.mxu0 0
  %224 = vmatpush2.bf16.msra.mxu0 0
  %225 = vmatprep.subr.bf16.mxu0 0
  %226 = vmatpush2.bf16.msra.mxu0 0
  %227 = vmatprep.mubr.bf16.mxu0 0
  %228 = vmatmul.mubr.bf16.gmra.mxu0 %v193
  %v229 = vpop.f32.mrf.mxu0
  %v230 = vadd.f32 %v178, %v229
  %v231 = vpop.f32.mrf.mxu0
  %v232 = vpop.f32.mrf.mxu0
  %v233 = vadd.f32 %v178, %v232
  %v234 = vpop.f32.mrf.mxu0
  %235 = vdwg.mxu0
  %v236 = vmax.f32 %v230, 0.0
  %v237 = vmax.f32 %v233, 0.0
  %v238 = vpack.c.bf16 %v237, %v236
  %v239 = vld [vmem:[%s8] sm:$0xf]
  %v240 = vld [vmem:[%s8 + $0x4] sm:$0xf]
  %v241 = vld [vmem:[%s8 + $0x8] sm:$0xf]
  %v242 = vld [vmem:[%s8 + $0xc] sm:$0xf]
  %v243 = vld [vmem:[%s8 + $0x10] sm:$0xf]
  %v244 = vld [vmem:[%s8 + $0x14] sm:$0xf]
  %v245 = vld [vmem:[%s8 + $0x18] sm:$0xf]
  %v246 = vld [vmem:[%s8 + $0x1c] sm:$0xf]
  %v247 = vld [vmem:[%s9] sm:$0x1]
  %v249 = vlaneseq
  %v250 = vshrl.u32 %v249, 7
  %v251 = vsub.s32 0, %v250
  %v252 = vrot.slane %v247, %v251
  %v262 = vunpack.c.l.b16 %v239
  %v263 = vunpack.c.l.b16 %v240
  %v264 = vunpack.c.l.b16 %v241
  %v265 = vunpack.c.l.b16 %v242
  %v266 = vunpack.c.l.b16 %v243
  %v267 = vunpack.c.l.b16 %v244
  %v268 = vunpack.c.l.b16 %v245
  %v269 = vunpack.c.l.b16 %v246
  %v270 = vpack.c.b16 %v263, %v262
  %v271 = vpack.c.b16 %v265, %v264
  %v272 = vpack.c.b16 %v267, %v266
  %v273 = vpack.c.b16 %v269, %v268
  %vm278 = vcmask 523264
  %v280 = vsel %vm278, %v238, 0
  %282 = vmatprep.subr.bf16.mxu0 0
  %283 = vmatpush1.bf16.msra.mxu0 0
  %284 = vmatprep.subr.bf16.mxu0 0
  %285 = vmatpush1.bf16.msra.mxu0 0
  %286 = vmatprep.subr.bf16.mxu0 0
  %287 = vmatpush1.bf16.msra.mxu0 0
  %288 = vmatprep.subr.bf16.mxu0 0
  %289 = vmatpush1.bf16.msra.mxu0 0
  %290 = vmatprep.subr.bf16.mxu0 0
  %291 = vmatpush1.bf16.msra.mxu0 %v273
  %292 = vmatprep.subr.bf16.mxu0 0
  %293 = vmatpush1.bf16.msra.mxu0 %v272
  %294 = vmatprep.subr.bf16.mxu0 0
  %295 = vmatpush1.bf16.msra.mxu0 %v271
  %296 = vmatprep.subr.bf16.mxu0 0
  %297 = vmatpush1.bf16.msra.mxu0 %v270
  %298 = vmatprep.subr.bf16.mxu0 0
  %299 = vmatpush2.bf16.msra.mxu0 0
  %300 = vmatprep.subr.bf16.mxu0 0
  %301 = vmatpush2.bf16.msra.mxu0 0
  %302 = vmatprep.subr.bf16.mxu0 0
  %303 = vmatpush2.bf16.msra.mxu0 0
  %304 = vmatprep.subr.bf16.mxu0 0
  %305 = vmatpush2.bf16.msra.mxu0 0
  %306 = vmatprep.subr.bf16.mxu0 0
  %307 = vmatpush2.bf16.msra.mxu0 0
  %308 = vmatprep.subr.bf16.mxu0 0
  %309 = vmatpush2.bf16.msra.mxu0 0
  %310 = vmatprep.subr.bf16.mxu0 0
  %311 = vmatpush2.bf16.msra.mxu0 0
  %312 = vmatprep.subr.bf16.mxu0 0
  %313 = vmatpush2.bf16.msra.mxu0 0
  %314 = vmatprep.mubr.bf16.mxu0 0
  %315 = vmatmul.mubr.bf16.gmra.mxu0 %v280
  %v316 = vpop.f32.mrf.mxu0
  %v317 = vadd.f32 %v252, %v316
  %v318 = vpop.f32.mrf.mxu0
  %v319 = vpop.f32.mrf.mxu0
  %v320 = vadd.f32 %v252, %v319
  %v321 = vpop.f32.mrf.mxu0
  %322 = vdwg.mxu0
  %v323 = vadd.f32 %v166, %v317
  %v324 = vadd.f32 %v167, %v320
  %v325 = vld [vmem:[%s10] sm:$0x1]
  %v326 = vld [vmem:[%s11] sm:$0x1]
  %v327 = vsel %vm76, %v323, 0.0
  %328 = vadd.xlane.f32.xlu0 %v327
  %v329 = vpop.xlane.xlu0 %328
  %v330 = vsel %vm76, %v324, 0.0
  %331 = vadd.xlane.f32.xlu0 %v330
  %v332 = vpop.xlane.xlu0 %331
  %v333 = vmul.f32 %v329, %v131
  %v334 = vmul.f32 %v332, %v131
  %v335 = vsub.f32 %v323, %v333
  %v336 = vsub.f32 %v324, %v334
  %v337 = vmul.f32 %v335, %v335
  %v338 = vmul.f32 %v336, %v336
  %v339 = vsel %vm76, %v337, 0.0
  %340 = vadd.xlane.f32.xlu0 %v339
  %v341 = vpop.xlane.xlu0 %340
  %v342 = vsel %vm76, %v338, 0.0
  %343 = vadd.xlane.f32.xlu0 %v342
  %v344 = vpop.xlane.xlu0 %343
  %v345 = vmul.f32 %v341, %v131
  %v346 = vmul.f32 %v344, %v131
  %v347 = vadd.f32 %v345, 1e-05
  %v348 = vadd.f32 %v346, 1e-05
  %v349 = vrsqrt.pop %v347
  %v350 = vrsqrt.pop %v348
  %v351 = vmul.f32 %v335, %v349
  %v352 = vmul.f32 %v336, %v350
  %v354 = vlaneseq
  %v355 = vshrl.u32 %v354, 7
  %v356 = vsub.s32 0, %v355
  %v357 = vrot.slane %v325, %v356
  %v359 = vmul.f32 %v351, %v357
  %v360 = vmul.f32 %v352, %v357
  %v362 = vlaneseq
  %v363 = vshrl.u32 %v362, 7
  %v364 = vsub.s32 0, %v363
  %v365 = vrot.slane %v326, %v364
  %v367 = vadd.f32 %v359, %v365
  %v368 = vadd.f32 %v360, %v365
  %v369 = vpack.c.bf16 %v368, %v367
  %v371 = vunpack.c.l.b16 %v369
  %v372 = vunpack.c.h.b16 %v369
  %v373 = vpack.c.b16 %v371, %v371
  %v374 = vpack.c.b16 %v372, %v372
  %vm377 = vcmask 257024
  %378 = vst.msk [vmem:[%s12] sm:$0xf] %vm377, %v373
  %379 = vst.msk [vmem:[%s12 + $0x4] sm:$0xf] %vm377, %v374
  // Predicated region
  $region50: #{mlm_transformer_forward.9} parent=0 // pred_check
    _
  $region51: #{mlm_transformer_forward.9} parent=0 // pred_check_branch
    %381 = sbr.rel (0) target = $region53
  $region52: #{mlm_transformer_forward.9} parent=0 // pred_region
    _
  $region53: #{mlm_transformer_forward.9} parent=0 // pred_fallthru
    _
  // Predicated region
  $region54: #{mlm_transformer_forward.9} parent=0 // pred_check
    _
  $region55: #{mlm_transformer_forward.9} parent=0 // pred_check_branch
    %383 = sbr.rel (0) target = $region57
  $region56: #{mlm_transformer_forward.9} parent=0 // pred_region
    _
  $region57: #{mlm_transformer_forward.9} parent=0 // pred_fallthru
    _

</llo_original>
